<compile_context>
chip_gen: v5e
topology: v5e:2x2
jax: 0.10.0
libtpu: 0.0.40
codegen_flags: <defaults>
</compile_context>

<pallas_src>
import functools
import math

import jax
import jax.numpy as jnp
from jax.experimental import pallas as pl
from jax.experimental.pallas import tpu as pltpu


def _encoder_layer_kernel(
    x_ref, mask_ref,
    g1_ref, be1_ref,
    wqkv_ref, bqkv_ref, wo_ref, bo_ref,
    g2_ref, be2_ref,
    w1_ref, b1_ref, w2_ref, b2_ref,
    o_ref,
    *, num_heads, eps, ffn_chunk):
    f32 = jnp.float32
    bf16 = jnp.bfloat16

    x = x_ref[...].astype(f32)                       # (BB, S, D)
    BB, S, D = x.shape
    H = num_heads
    Dh = D // H
    M = BB * S

    def layer_norm(t, g, b):                         # g, b: (1, D) -> broadcast
        mu = jnp.mean(t, axis=-1, keepdims=True)
        var = jnp.mean(jnp.square(t - mu), axis=-1, keepdims=True)
        return (t - mu) * jax.lax.rsqrt(var + eps) * g + b

    # ---------- sublayer 0: x + self_attn(LN1(x), LN1(x), LN1(x), mask) -----
    h1_bf = layer_norm(x, g1_ref[...], be1_ref[...]).reshape(M, D).astype(bf16)
    # fused QKV projection (1/sqrt(Dh) already folded into Wq/bq by wrapper)
    qkv = jnp.dot(h1_bf, wqkv_ref[...], preferred_element_type=f32) + bqkv_ref[...]
    q = qkv[:, 0 * D:1 * D].astype(bf16).reshape(BB, S, D)
    k = qkv[:, 1 * D:2 * D].astype(bf16).reshape(BB, S, D)
    v = qkv[:, 2 * D:3 * D].astype(bf16).reshape(BB, S, D)

    key_mask = mask_ref[...] > 0.0                   # (BB, 1, S) broadcasts over q rows
    neg = f32(-1e9)

    # Static unroll over heads: head-batched 4D einsum would need a (0,2,1,3)
    # transpose that Mosaic does not lower; slices here are static lane slices.
    ctx_heads = []
    for h in range(H):
        lo = h * Dh
        qh = q[:, :, lo:lo + Dh]
        kh = k[:, :, lo:lo + Dh]
        vh = v[:, :, lo:lo + Dh]
        s = jnp.einsum("bqd,bkd->bqk", qh, kh, preferred_element_type=f32)
        s = jnp.where(key_mask, s, neg)
        m = jnp.max(s, axis=-1, keepdims=True)
        e = jnp.exp(s - m)
        denom = jnp.sum(e, axis=-1, keepdims=True)
        p = e * pl.reciprocal(denom, approx=True)    # softmax divide on the EUP
        ctx_heads.append(jnp.einsum("bqk,bkd->bqd", p.astype(bf16), vh,
                                    preferred_element_type=f32))
    ctx = jnp.concatenate(ctx_heads, axis=-1)        # (BB, S, D), f32

    attn = jnp.dot(ctx.reshape(M, D).astype(bf16), wo_ref[...],
                   preferred_element_type=f32) + bo_ref[...]
    x1 = x + attn.reshape(BB, S, D)
    # TODO(synk): nn.Dropout treated as eval-mode identity (p ignored).

    # ---------- sublayer 1: x + feed_forward(LN2(x)) -------------------------
    h2_bf = layer_norm(x1, g2_ref[...], be2_ref[...]).reshape(M, D).astype(bf16)
    F = w1_ref.shape[1]
    ff = jnp.zeros((M, D), dtype=f32)
    for c0 in range(0, F, ffn_chunk):                # cap live (M, chunk) intermediate
        c1 = min(F, c0 + ffn_chunk)
        hf = jnp.dot(h2_bf, w1_ref[:, c0:c1],
                     preferred_element_type=f32) + b1_ref[:, c0:c1]
        hf = jnp.maximum(hf, 0.0).astype(bf16)       # ReLU
        ff = ff + jnp.dot(hf, w2_ref[c0:c1, :], preferred_element_type=f32)
    ff = ff + b2_ref[...]

    o_ref[...] = (x1 + ff.reshape(BB, S, D)).astype(o_ref.dtype)


def _pick_batch_block(B):
    if B <= 1:
        return 1
    # Keep the grid >= 2 steps so v7x's second TensorCore gets work; stay <= 8
    # rows so the per-step block is modest (v5e/v6e can override with a larger
    # batch_block to amortize the ~0.35us/step pipeline overhead).
    cap = max(1, min(8, B // 2))
    return max(d for d in range(1, cap + 1) if B % d == 0)


def _vmem_budget_bytes(BB, S, D, F, ffn_chunk):
    f32b, bf16b = 4, 2
    io = 2 * 2 * BB * S * D * f32b                              # x in/out, double-buffered
    weights = 2 * (D * 3 * D + D * D + D * F + F * D) * bf16b   # bf16 weights, double-buffered
    small = 2 * (3 * D + 4 * D + F + 4 * D + S) * f32b
    chunk = min(F, ffn_chunk)
    inter = BB * S * (3 * D + 4 * D + chunk + 2 * S) * f32b     # qkv/ctx/scores/hf working set
    budget = io + weights + small + inter + (8 << 20)           # + headroom
    try:
        phys = int(pltpu.get_tpu_info().vmem_capacity_bytes)
    except Exception:
        phys = 64 * 1024 * 1024                                 # conservative (v7x)
    cap = int(phys * 0.85)
    return int(min(cap, max(32 * 1024 * 1024, budget)))


def encoder_layer(x, mask, params, *, num_heads, eps=1e-5, batch_block=None,
                  ffn_chunk=1024, single_buffer_weights=False):
    """x: (B,S,D) f32, mask: (B,S) (1=keep, 0=mask) -> (B,S,D) f32."""
    B, S, D = x.shape
    F = params["w1"].shape[1]
    assert D % num_heads == 0
    if batch_block is None:
        batch_block = _pick_batch_block(B)
    BB = batch_block
    assert B % BB == 0
    grid = (B // BB,)

    f32, bf16 = jnp.float32, jnp.bfloat16
    scale = 1.0 / math.sqrt(D // num_heads)

    # Fuse Q/K/V into one (D, 3D) weight, fold the attention scale into Wq/bq,
    # and ship all weight matrices as bf16 (halves DMA + VMEM).
    wqkv = jnp.concatenate(
        [params["wq"] * scale, params["wk"], params["wv"]], axis=1).astype(bf16)
    bqkv = jnp.concatenate(
        [params["bq"] * scale, params["bk"], params["bv"]]).reshape(1, 3 * D).astype(f32)

    to_row = lambda a: a.reshape(1, -1).astype(f32)
    args = (
        x,
        mask.reshape(B, 1, S).astype(f32),
        to_row(params["ln1_g"]), to_row(params["ln1_b"]),
        wqkv, bqkv,
        params["wo"].astype(bf16), to_row(params["bo"]),
        to_row(params["ln2_g"]), to_row(params["ln2_b"]),
        params["w1"].astype(bf16), to_row(params["b1"]),
        params["w2"].astype(bf16), to_row(params["b2"]),
    )

    xmap = lambda i: (i, 0, 0)
    mmap = lambda i: (i, 0, 0)
    wmap = lambda i: (0, 0)
    # Grid-invariant operands: optionally single-buffer (VMEM-tight v7x shapes).
    wkw = dict(pipeline_mode=pl.Buffered(1)) if single_buffer_weights else {}
    wsp = lambda shape: pl.BlockSpec(shape, wmap, **wkw)

    in_specs = [
        pl.BlockSpec((BB, S, D), xmap),                 # x
        pl.BlockSpec((BB, 1, S), mmap),                 # mask
        wsp((1, D)), wsp((1, D)),                       # LN1 g, b
        wsp((D, 3 * D)), wsp((1, 3 * D)),               # Wqkv, bqkv
        wsp((D, D)), wsp((1, D)),                       # Wo, bo
        wsp((1, D)), wsp((1, D)),                       # LN2 g, b
        wsp((D, F)), wsp((1, F)),                       # W1, b1
        wsp((F, D)), wsp((1, D)),                       # W2, b2
    ]

    kernel = functools.partial(_encoder_layer_kernel, num_heads=num_heads,
                               eps=eps, ffn_chunk=ffn_chunk)

    return pl.pallas_call(
        kernel,
        out_shape=jax.ShapeDtypeStruct((B, S, D), x.dtype),
        grid_spec=pltpu.PrefetchScalarGridSpec(
            num_scalar_prefetch=0,
            grid=grid,
            in_specs=in_specs,
            out_specs=pl.BlockSpec((BB, S, D), xmap),
        ),
        compiler_params=pltpu.CompilerParams(
            dimension_semantics=("parallel",),          # megacore on v7x
            vmem_limit_bytes=_vmem_budget_bytes(BB, S, D, F, ffn_chunk)),
    )(*args)


def _reference(x, mask, params, *, num_heads, eps=1e-5):
    def ln(t, g, b):
        mu = jnp.mean(t, axis=-1, keepdims=True)
        var = jnp.mean((t - mu) ** 2, axis=-1, keepdims=True)
        return (t - mu) / jnp.sqrt(var + eps) * g + b

    B, S, D = x.shape
    H = num_heads
    Dh = D // H

    h1 = ln(x, params["ln1_g"], params["ln1_b"])
    q = h1 @ params["wq"] + params["bq"]
    k = h1 @ params["wk"] + params["bk"]
    v = h1 @ params["wv"] + params["bv"]
    q = q.reshape(B, S, H, Dh).transpose(0, 2, 1, 3)
    k = k.reshape(B, S, H, Dh).transpose(0, 2, 1, 3)
    v = v.reshape(B, S, H, Dh).transpose(0, 2, 1, 3)
    scores = (q @ jnp.swapaxes(k, -1, -2)) / math.sqrt(Dh)
    scores = jnp.where(mask[:, None, None, :] > 0, scores, -1e9)
    w = jax.nn.softmax(scores, axis=-1)
    ctx = (w @ v).transpose(0, 2, 1, 3).reshape(B, S, D)
    x1 = x + ctx @ params["wo"] + params["bo"]
    h2 = ln(x1, params["ln2_g"], params["ln2_b"])
    ff = jax.nn.relu(h2 @ params["w1"] + params["b1"]) @ params["w2"] + params["b2"]
    return x1 + ff


if __name__ == "__main__":
    B, S, D, H, F = 2, 8, 32, 4, 64
    key = jax.random.PRNGKey(0)
    ks = jax.random.split(key, 16)

    def rnd(k, shape, scale):
        return jax.random.normal(k, shape, dtype=jnp.float32) * scale

    params = {
        "ln1_g": 1.0 + 0.1 * jax.random.normal(ks[0], (D,), jnp.float32),
        "ln1_b": 0.1 * jax.random.normal(ks[1], (D,), jnp.float32),
        "wq": rnd(ks[2], (D, D), 1 / math.sqrt(D)), "bq": rnd(ks[3], (D,), 0.02),
        "wk": rnd(ks[4], (D, D), 1 / math.sqrt(D)), "bk": rnd(ks[5], (D,), 0.02),
        "wv": rnd(ks[6], (D, D), 1 / math.sqrt(D)), "bv": rnd(ks[7], (D,), 0.02),
        "wo": rnd(ks[8], (D, D), 1 / math.sqrt(D)), "bo": rnd(ks[9], (D,), 0.02),
        "ln2_g": 1.0 + 0.1 * jax.random.normal(ks[10], (D,), jnp.float32),
        "ln2_b": 0.1 * jax.random.normal(ks[11], (D,), jnp.float32),
        "w1": rnd(ks[12], (D, F), 1 / math.sqrt(D)), "b1": rnd(ks[13], (F,), 0.02),
        "w2": rnd(ks[14], (F, D), 1 / math.sqrt(F)), "b2": rnd(ks[15], (D,), 0.02),
    }

    x = jax.random.normal(jax.random.fold_in(key, 123), (B, S, D), dtype=jnp.float32)
    mask = jnp.ones((B, S), dtype=jnp.float32).at[1, 6:].set(0.0)  # pad last 2 keys of batch 1

    out = encoder_layer(x, mask, params, num_heads=H)
    jax.block_until_ready(out)

    ref = _reference(x, mask, params, num_heads=H)
    assert out.shape == ref.shape
    # tolerance covers bf16 MXU operands + the EUP approximate-reciprocal softmax
    max_diff = float(jnp.max(jnp.abs(out - ref)))
    assert jnp.allclose(out, ref, atol=5e-2, rtol=5e-2), max_diff

    print("KERNEL_OK")
</pallas_src>

<mosaic_0001>
module attributes {stable_mosaic.version = 11 : i64} {
  func.func @_encoder_layer_kernel(%arg0: i32, %arg1: memref<1x8x32xf32, #tpu.memory_space<vmem>>, %arg2: memref<1x1x8xf32, #tpu.memory_space<vmem>>, %arg3: memref<1x32xf32, #tpu.memory_space<vmem>>, %arg4: memref<1x32xf32, #tpu.memory_space<vmem>>, %arg5: memref<32x96xbf16, #tpu.memory_space<vmem>>, %arg6: memref<1x96xf32, #tpu.memory_space<vmem>>, %arg7: memref<32x32xbf16, #tpu.memory_space<vmem>>, %arg8: memref<1x32xf32, #tpu.memory_space<vmem>>, %arg9: memref<1x32xf32, #tpu.memory_space<vmem>>, %arg10: memref<1x32xf32, #tpu.memory_space<vmem>>, %arg11: memref<32x64xbf16, #tpu.memory_space<vmem>>, %arg12: memref<1x64xf32, #tpu.memory_space<vmem>>, %arg13: memref<64x32xbf16, #tpu.memory_space<vmem>>, %arg14: memref<1x32xf32, #tpu.memory_space<vmem>>, %arg15: memref<1x8x32xf32, #tpu.memory_space<vmem>>) attributes {dimension_semantics = [#tpu.dimension_semantics<parallel>], iteration_bounds = array<i64: 2>, scalar_prefetch = 0 : i64, scratch_operands = 0 : i64, tpu.core_type = #tpu.core_type<tc>, window_params = [{transform_indices = @transform_0, window_bounds = array<i64: 1, 8, 32>}, {transform_indices = @transform_1, window_bounds = array<i64: 1, 1, 8>}, {pipeline_mode = #tpu.pipeline_mode<synchronous>, transform_indices = @transform_2, window_bounds = array<i64: 1, 32>}, {pipeline_mode = #tpu.pipeline_mode<synchronous>, transform_indices = @transform_3, window_bounds = array<i64: 1, 32>}, {pipeline_mode = #tpu.pipeline_mode<synchronous>, transform_indices = @transform_4, window_bounds = array<i64: 32, 96>}, {pipeline_mode = #tpu.pipeline_mode<synchronous>, transform_indices = @transform_5, window_bounds = array<i64: 1, 96>}, {pipeline_mode = #tpu.pipeline_mode<synchronous>, transform_indices = @transform_6, window_bounds = array<i64: 32, 32>}, {pipeline_mode = #tpu.pipeline_mode<synchronous>, transform_indices = @transform_7, window_bounds = array<i64: 1, 32>}, {pipeline_mode = #tpu.pipeline_mode<synchronous>, transform_indices = @transform_8, window_bounds = array<i64: 1, 32>}, {pipeline_mode = #tpu.pipeline_mode<synchronous>, transform_indices = @transform_9, window_bounds = array<i64: 1, 32>}, {pipeline_mode = #tpu.pipeline_mode<synchronous>, transform_indices = @transform_10, window_bounds = array<i64: 32, 64>}, {pipeline_mode = #tpu.pipeline_mode<synchronous>, transform_indices = @transform_11, window_bounds = array<i64: 1, 64>}, {pipeline_mode = #tpu.pipeline_mode<synchronous>, transform_indices = @transform_12, window_bounds = array<i64: 64, 32>}, {pipeline_mode = #tpu.pipeline_mode<synchronous>, transform_indices = @transform_13, window_bounds = array<i64: 1, 32>}, {transform_indices = @transform_14, window_bounds = array<i64: 1, 8, 32>}]} {
    %c0 = arith.constant 0 : index
    %c0_0 = arith.constant 0 : index
    %c0_1 = arith.constant 0 : index
    %0 = vector.load %arg1[%c0, %c0_0, %c0_1] : memref<1x8x32xf32, #tpu.memory_space<vmem>>, vector<1x8x32xf32>
    %c0_2 = arith.constant 0 : index
    %c0_3 = arith.constant 0 : index
    %1 = vector.load %arg3[%c0_2, %c0_3] : memref<1x32xf32, #tpu.memory_space<vmem>>, vector<1x32xf32>
    %c0_4 = arith.constant 0 : index
    %c0_5 = arith.constant 0 : index
    %2 = vector.load %arg4[%c0_4, %c0_5] : memref<1x32xf32, #tpu.memory_space<vmem>>, vector<1x32xf32>
    %cst = arith.constant dense<0.000000e+00> : vector<1x8xf32>
    %3 = vector.multi_reduction <add>, %0, %cst [2] : vector<1x8x32xf32> to vector<1x8xf32>
    %4 = vector.shape_cast %3 : vector<1x8xf32> to vector<1x8x1xf32>
    %cst_6 = arith.constant 3.200000e+01 : f32
    %5 = vector.broadcast %cst_6 : f32 to vector<1x8x1xf32>
    %6 = arith.divf %4, %5 : vector<1x8x1xf32>
    %7 = vector.broadcast %6 : vector<1x8x1xf32> to vector<1x8x32xf32>
    %8 = arith.subf %0, %7 : vector<1x8x32xf32>
    %9 = arith.mulf %8, %8 : vector<1x8x32xf32>
    %cst_7 = arith.constant dense<0.000000e+00> : vector<1x8xf32>
    %10 = vector.multi_reduction <add>, %9, %cst_7 [2] : vector<1x8x32xf32> to vector<1x8xf32>
    %11 = vector.shape_cast %10 : vector<1x8xf32> to vector<1x8x1xf32>
    %cst_8 = arith.constant 3.200000e+01 : f32
    %12 = vector.broadcast %cst_8 : f32 to vector<1x8x1xf32>
    %13 = arith.divf %11, %12 : vector<1x8x1xf32>
    %14 = vector.broadcast %6 : vector<1x8x1xf32> to vector<1x8x32xf32>
    %15 = arith.subf %0, %14 : vector<1x8x32xf32>
    %cst_9 = arith.constant 9.99999974E-6 : f32
    %16 = vector.broadcast %cst_9 : f32 to vector<1x8x1xf32>
    %17 = arith.addf %13, %16 : vector<1x8x1xf32>
    %18 = math.rsqrt %17 : vector<1x8x1xf32>
    %19 = vector.broadcast %18 : vector<1x8x1xf32> to vector<1x8x32xf32>
    %20 = arith.mulf %15, %19 : vector<1x8x32xf32>
    %21 = vector.shape_cast %1 : vector<1x32xf32> to vector<1x1x32xf32>
    %22 = vector.broadcast %21 : vector<1x1x32xf32> to vector<1x8x32xf32>
    %23 = arith.mulf %20, %22 : vector<1x8x32xf32>
    %24 = vector.shape_cast %2 : vector<1x32xf32> to vector<1x1x32xf32>
    %25 = vector.broadcast %24 : vector<1x1x32xf32> to vector<1x8x32xf32>
    %26 = arith.addf %23, %25 : vector<1x8x32xf32>
    %27 = vector.shape_cast %26 : vector<1x8x32xf32> to vector<8x32xf32>
    %28 = arith.truncf %27 : vector<8x32xf32> to vector<8x32xbf16>
    %c0_10 = arith.constant 0 : index
    %c0_11 = arith.constant 0 : index
    %29 = vector.load %arg5[%c0_10, %c0_11] : memref<32x96xbf16, #tpu.memory_space<vmem>>, vector<32x96xbf16>
    %cst_12 = arith.constant dense<0.000000e+00> : vector<8x96xf32>
    %30 = tpu.matmul %28, %29, %cst_12 {dimension_numbers = #tpu.dot_dimension_numbers<[1], [0], [0], [1], [0, 0, 1, 1], [], []>} : vector<8x32xbf16>, vector<32x96xbf16>, vector<8x96xf32> -> vector<8x96xf32>
    %c0_13 = arith.constant 0 : index
    %c0_14 = arith.constant 0 : index
    %31 = vector.load %arg6[%c0_13, %c0_14] : memref<1x96xf32, #tpu.memory_space<vmem>>, vector<1x96xf32>
    %32 = vector.broadcast %31 : vector<1x96xf32> to vector<8x96xf32>
    %33 = arith.addf %30, %32 : vector<8x96xf32>
    %34 = vector.extract_strided_slice %33 {offsets = [0, 0], sizes = [8, 32], strides = [1, 1]} : vector<8x96xf32> to vector<8x32xf32>
    %35 = arith.truncf %34 : vector<8x32xf32> to vector<8x32xbf16>
    %36 = vector.shape_cast %35 : vector<8x32xbf16> to vector<1x8x32xbf16>
    %37 = vector.extract_strided_slice %33 {offsets = [0, 32], sizes = [8, 32], strides = [1, 1]} : vector<8x96xf32> to vector<8x32xf32>
    %38 = arith.truncf %37 : vector<8x32xf32> to vector<8x32xbf16>
    %39 = vector.shape_cast %38 : vector<8x32xbf16> to vector<1x8x32xbf16>
    %40 = vector.extract_strided_slice %33 {offsets = [0, 64], sizes = [8, 32], strides = [1, 1]} : vector<8x96xf32> to vector<8x32xf32>
    %41 = arith.truncf %40 : vector<8x32xf32> to vector<8x32xbf16>
    %42 = vector.shape_cast %41 : vector<8x32xbf16> to vector<1x8x32xbf16>
    %c0_15 = arith.constant 0 : index
    %c0_16 = arith.constant 0 : index
    %c0_17 = arith.constant 0 : index
    %43 = vector.load %arg2[%c0_15, %c0_16, %c0_17] : memref<1x1x8xf32, #tpu.memory_space<vmem>>, vector<1x1x8xf32>
    %cst_18 = arith.constant 0.000000e+00 : f32
    %44 = vector.broadcast %cst_18 : f32 to vector<1x1x8xf32>
    %45 = arith.cmpf ogt, %43, %44 : vector<1x1x8xf32>
    %46 = vector.extract_strided_slice %36 {offsets = [0, 0, 0], sizes = [1, 8, 8], strides = [1, 1, 1]} : vector<1x8x32xbf16> to vector<1x8x8xbf16>
    %47 = vector.extract_strided_slice %39 {offsets = [0, 0, 0], sizes = [1, 8, 8], strides = [1, 1, 1]} : vector<1x8x32xbf16> to vector<1x8x8xbf16>
    %48 = vector.extract_strided_slice %42 {offsets = [0, 0, 0], sizes = [1, 8, 8], strides = [1, 1, 1]} : vector<1x8x32xbf16> to vector<1x8x8xbf16>
    "tpu.trace_start"() <{level = 10 : i32, message = "bqd,bkd->bqk"}> : () -> ()
    %cst_19 = arith.constant dense<0.000000e+00> : vector<1x8x8xf32>
    %49 = tpu.matmul %46, %47, %cst_19 {dimension_numbers = #tpu.dot_dimension_numbers<[2], [2], [1], [1], [0, 0, 0, 1, 1, 1], [0], [0]>} : vector<1x8x8xbf16>, vector<1x8x8xbf16>, vector<1x8x8xf32> -> vector<1x8x8xf32>
    %cst_20 = arith.constant -1.000000e+09 : f32
    "tpu.trace_stop"() : () -> ()
    %50 = vector.shape_cast %45 : vector<1x1x8xi1> to vector<1x1x8xi1>
    %51 = vector.broadcast %50 : vector<1x1x8xi1> to vector<1x8x8xi1>
    %52 = vector.broadcast %cst_20 : f32 to vector<1x8x8xf32>
    %53 = arith.select %51, %49, %52 : vector<1x8x8xi1>, vector<1x8x8xf32>
    %cst_21 = arith.constant dense<0xFF800000> : vector<1x8xf32>
    %54 = vector.multi_reduction <maximumf>, %53, %cst_21 [2] : vector<1x8x8xf32> to vector<1x8xf32>
    %55 = vector.shape_cast %54 : vector<1x8xf32> to vector<1x8x1xf32>
    %56 = vector.broadcast %55 : vector<1x8x1xf32> to vector<1x8x8xf32>
    %57 = arith.subf %53, %56 : vector<1x8x8xf32>
    %58 = math.exp %57 : vector<1x8x8xf32>
    %cst_22 = arith.constant dense<0.000000e+00> : vector<1x8xf32>
    %59 = vector.multi_reduction <add>, %58, %cst_22 [2] : vector<1x8x8xf32> to vector<1x8xf32>
    %60 = vector.shape_cast %59 : vector<1x8xf32> to vector<1x8x1xf32>
    %61 = tpu.reciprocal %60 {approx = true} : vector<1x8x1xf32> -> vector<1x8x1xf32>
    %62 = vector.broadcast %61 : vector<1x8x1xf32> to vector<1x8x8xf32>
    %63 = arith.mulf %58, %62 : vector<1x8x8xf32>
    %64 = arith.truncf %63 : vector<1x8x8xf32> to vector<1x8x8xbf16>
    "tpu.trace_start"() <{level = 10 : i32, message = "bqk,bkd->bqd"}> : () -> ()
    %cst_23 = arith.constant dense<0.000000e+00> : vector<1x8x8xf32>
    %65 = tpu.matmul %64, %48, %cst_23 {dimension_numbers = #tpu.dot_dimension_numbers<[2], [1], [1], [2], [0, 0, 0, 1, 1, 2], [0], [0]>} : vector<1x8x8xbf16>, vector<1x8x8xbf16>, vector<1x8x8xf32> -> vector<1x8x8xf32>
    "tpu.trace_stop"() : () -> ()
    %66 = vector.extract_strided_slice %36 {offsets = [0, 0, 8], sizes = [1, 8, 8], strides = [1, 1, 1]} : vector<1x8x32xbf16> to vector<1x8x8xbf16>
    %67 = vector.extract_strided_slice %39 {offsets = [0, 0, 8], sizes = [1, 8, 8], strides = [1, 1, 1]} : vector<1x8x32xbf16> to vector<1x8x8xbf16>
    %68 = vector.extract_strided_slice %42 {offsets = [0, 0, 8], sizes = [1, 8, 8], strides = [1, 1, 1]} : vector<1x8x32xbf16> to vector<1x8x8xbf16>
    "tpu.trace_start"() <{level = 10 : i32, message = "bqd,bkd->bqk"}> : () -> ()
    %cst_24 = arith.constant dense<0.000000e+00> : vector<1x8x8xf32>
    %69 = tpu.matmul %66, %67, %cst_24 {dimension_numbers = #tpu.dot_dimension_numbers<[2], [2], [1], [1], [0, 0, 0, 1, 1, 1], [0], [0]>} : vector<1x8x8xbf16>, vector<1x8x8xbf16>, vector<1x8x8xf32> -> vector<1x8x8xf32>
    %cst_25 = arith.constant -1.000000e+09 : f32
    "tpu.trace_stop"() : () -> ()
    %70 = vector.shape_cast %45 : vector<1x1x8xi1> to vector<1x1x8xi1>
    %71 = vector.broadcast %70 : vector<1x1x8xi1> to vector<1x8x8xi1>
    %72 = vector.broadcast %cst_25 : f32 to vector<1x8x8xf32>
    %73 = arith.select %71, %69, %72 : vector<1x8x8xi1>, vector<1x8x8xf32>
    %cst_26 = arith.constant dense<0xFF800000> : vector<1x8xf32>
    %74 = vector.multi_reduction <maximumf>, %73, %cst_26 [2] : vector<1x8x8xf32> to vector<1x8xf32>
    %75 = vector.shape_cast %74 : vector<1x8xf32> to vector<1x8x1xf32>
    %76 = vector.broadcast %75 : vector<1x8x1xf32> to vector<1x8x8xf32>
    %77 = arith.subf %73, %76 : vector<1x8x8xf32>
    %78 = math.exp %77 : vector<1x8x8xf32>
    %cst_27 = arith.constant dense<0.000000e+00> : vector<1x8xf32>
    %79 = vector.multi_reduction <add>, %78, %cst_27 [2] : vector<1x8x8xf32> to vector<1x8xf32>
    %80 = vector.shape_cast %79 : vector<1x8xf32> to vector<1x8x1xf32>
    %81 = tpu.reciprocal %80 {approx = true} : vector<1x8x1xf32> -> vector<1x8x1xf32>
    %82 = vector.broadcast %81 : vector<1x8x1xf32> to vector<1x8x8xf32>
    %83 = arith.mulf %78, %82 : vector<1x8x8xf32>
    %84 = arith.truncf %83 : vector<1x8x8xf32> to vector<1x8x8xbf16>
    "tpu.trace_start"() <{level = 10 : i32, message = "bqk,bkd->bqd"}> : () -> ()
    %cst_28 = arith.constant dense<0.000000e+00> : vector<1x8x8xf32>
    %85 = tpu.matmul %84, %68, %cst_28 {dimension_numbers = #tpu.dot_dimension_numbers<[2], [1], [1], [2], [0, 0, 0, 1, 1, 2], [0], [0]>} : vector<1x8x8xbf16>, vector<1x8x8xbf16>, vector<1x8x8xf32> -> vector<1x8x8xf32>
    "tpu.trace_stop"() : () -> ()
    %86 = vector.extract_strided_slice %36 {offsets = [0, 0, 16], sizes = [1, 8, 8], strides = [1, 1, 1]} : vector<1x8x32xbf16> to vector<1x8x8xbf16>
    %87 = vector.extract_strided_slice %39 {offsets = [0, 0, 16], sizes = [1, 8, 8], strides = [1, 1, 1]} : vector<1x8x32xbf16> to vector<1x8x8xbf16>
    %88 = vector.extract_strided_slice %42 {offsets = [0, 0, 16], sizes = [1, 8, 8], strides = [1, 1, 1]} : vector<1x8x32xbf16> to vector<1x8x8xbf16>
    "tpu.trace_start"() <{level = 10 : i32, message = "bqd,bkd->bqk"}> : () -> ()
    %cst_29 = arith.constant dense<0.000000e+00> : vector<1x8x8xf32>
    %89 = tpu.matmul %86, %87, %cst_29 {dimension_numbers = #tpu.dot_dimension_numbers<[2], [2], [1], [1], [0, 0, 0, 1, 1, 1], [0], [0]>} : vector<1x8x8xbf16>, vector<1x8x8xbf16>, vector<1x8x8xf32> -> vector<1x8x8xf32>
    %cst_30 = arith.constant -1.000000e+09 : f32
    "tpu.trace_stop"() : () -> ()
    %90 = vector.shape_cast %45 : vector<1x1x8xi1> to vector<1x1x8xi1>
    %91 = vector.broadcast %90 : vector<1x1x8xi1> to vector<1x8x8xi1>
    %92 = vector.broadcast %cst_30 : f32 to vector<1x8x8xf32>
    %93 = arith.select %91, %89, %92 : vector<1x8x8xi1>, vector<1x8x8xf32>
    %cst_31 = arith.constant dense<0xFF800000> : vector<1x8xf32>
    %94 = vector.multi_reduction <maximumf>, %93, %cst_31 [2] : vector<1x8x8xf32> to vector<1x8xf32>
    %95 = vector.shape_cast %94 : vector<1x8xf32> to vector<1x8x1xf32>
    %96 = vector.broadcast %95 : vector<1x8x1xf32> to vector<1x8x8xf32>
    %97 = arith.subf %93, %96 : vector<1x8x8xf32>
    %98 = math.exp %97 : vector<1x8x8xf32>
    %cst_32 = arith.constant dense<0.000000e+00> : vector<1x8xf32>
    %99 = vector.multi_reduction <add>, %98, %cst_32 [2] : vector<1x8x8xf32> to vector<1x8xf32>
    %100 = vector.shape_cast %99 : vector<1x8xf32> to vector<1x8x1xf32>
    %101 = tpu.reciprocal %100 {approx = true} : vector<1x8x1xf32> -> vector<1x8x1xf32>
    %102 = vector.broadcast %101 : vector<1x8x1xf32> to vector<1x8x8xf32>
    %103 = arith.mulf %98, %102 : vector<1x8x8xf32>
    %104 = arith.truncf %103 : vector<1x8x8xf32> to vector<1x8x8xbf16>
    "tpu.trace_start"() <{level = 10 : i32, message = "bqk,bkd->bqd"}> : () -> ()
    %cst_33 = arith.constant dense<0.000000e+00> : vector<1x8x8xf32>
    %105 = tpu.matmul %104, %88, %cst_33 {dimension_numbers = #tpu.dot_dimension_numbers<[2], [1], [1], [2], [0, 0, 0, 1, 1, 2], [0], [0]>} : vector<1x8x8xbf16>, vector<1x8x8xbf16>, vector<1x8x8xf32> -> vector<1x8x8xf32>
    "tpu.trace_stop"() : () -> ()
    %106 = vector.extract_strided_slice %36 {offsets = [0, 0, 24], sizes = [1, 8, 8], strides = [1, 1, 1]} : vector<1x8x32xbf16> to vector<1x8x8xbf16>
    %107 = vector.extract_strided_slice %39 {offsets = [0, 0, 24], sizes = [1, 8, 8], strides = [1, 1, 1]} : vector<1x8x32xbf16> to vector<1x8x8xbf16>
    %108 = vector.extract_strided_slice %42 {offsets = [0, 0, 24], sizes = [1, 8, 8], strides = [1, 1, 1]} : vector<1x8x32xbf16> to vector<1x8x8xbf16>
    "tpu.trace_start"() <{level = 10 : i32, message = "bqd,bkd->bqk"}> : () -> ()
    %cst_34 = arith.constant dense<0.000000e+00> : vector<1x8x8xf32>
    %109 = tpu.matmul %106, %107, %cst_34 {dimension_numbers = #tpu.dot_dimension_numbers<[2], [2], [1], [1], [0, 0, 0, 1, 1, 1], [0], [0]>} : vector<1x8x8xbf16>, vector<1x8x8xbf16>, vector<1x8x8xf32> -> vector<1x8x8xf32>
    %cst_35 = arith.constant -1.000000e+09 : f32
    "tpu.trace_stop"() : () -> ()
    %110 = vector.shape_cast %45 : vector<1x1x8xi1> to vector<1x1x8xi1>
    %111 = vector.broadcast %110 : vector<1x1x8xi1> to vector<1x8x8xi1>
    %112 = vector.broadcast %cst_35 : f32 to vector<1x8x8xf32>
    %113 = arith.select %111, %109, %112 : vector<1x8x8xi1>, vector<1x8x8xf32>
    %cst_36 = arith.constant dense<0xFF800000> : vector<1x8xf32>
    %114 = vector.multi_reduction <maximumf>, %113, %cst_36 [2] : vector<1x8x8xf32> to vector<1x8xf32>
    %115 = vector.shape_cast %114 : vector<1x8xf32> to vector<1x8x1xf32>
    %116 = vector.broadcast %115 : vector<1x8x1xf32> to vector<1x8x8xf32>
    %117 = arith.subf %113, %116 : vector<1x8x8xf32>
    %118 = math.exp %117 : vector<1x8x8xf32>
    %cst_37 = arith.constant dense<0.000000e+00> : vector<1x8xf32>
    %119 = vector.multi_reduction <add>, %118, %cst_37 [2] : vector<1x8x8xf32> to vector<1x8xf32>
    %120 = vector.shape_cast %119 : vector<1x8xf32> to vector<1x8x1xf32>
    %121 = tpu.reciprocal %120 {approx = true} : vector<1x8x1xf32> -> vector<1x8x1xf32>
    %122 = vector.broadcast %121 : vector<1x8x1xf32> to vector<1x8x8xf32>
    %123 = arith.mulf %118, %122 : vector<1x8x8xf32>
    %124 = arith.truncf %123 : vector<1x8x8xf32> to vector<1x8x8xbf16>
    "tpu.trace_start"() <{level = 10 : i32, message = "bqk,bkd->bqd"}> : () -> ()
    %cst_38 = arith.constant dense<0.000000e+00> : vector<1x8x8xf32>
    %125 = tpu.matmul %124, %108, %cst_38 {dimension_numbers = #tpu.dot_dimension_numbers<[2], [1], [1], [2], [0, 0, 0, 1, 1, 2], [0], [0]>} : vector<1x8x8xbf16>, vector<1x8x8xbf16>, vector<1x8x8xf32> -> vector<1x8x8xf32>
    "tpu.trace_stop"() : () -> ()
    %126 = tpu.concatenate %65, %85, %105, %125 in 2 : vector<1x8x8xf32>, vector<1x8x8xf32>, vector<1x8x8xf32>, vector<1x8x8xf32> -> vector<1x8x32xf32>
    %127 = vector.shape_cast %126 : vector<1x8x32xf32> to vector<8x32xf32>
    %128 = arith.truncf %127 : vector<8x32xf32> to vector<8x32xbf16>
    %c0_39 = arith.constant 0 : index
    %c0_40 = arith.constant 0 : index
    %129 = vector.load %arg7[%c0_39, %c0_40] : memref<32x32xbf16, #tpu.memory_space<vmem>>, vector<32x32xbf16>
    %cst_41 = arith.constant dense<0.000000e+00> : vector<8x32xf32>
    %130 = tpu.matmul %128, %129, %cst_41 {dimension_numbers = #tpu.dot_dimension_numbers<[1], [0], [0], [1], [0, 0, 1, 1], [], []>} : vector<8x32xbf16>, vector<32x32xbf16>, vector<8x32xf32> -> vector<8x32xf32>
    %c0_42 = arith.constant 0 : index
    %c0_43 = arith.constant 0 : index
    %131 = vector.load %arg8[%c0_42, %c0_43] : memref<1x32xf32, #tpu.memory_space<vmem>>, vector<1x32xf32>
    %132 = vector.broadcast %131 : vector<1x32xf32> to vector<8x32xf32>
    %133 = arith.addf %130, %132 : vector<8x32xf32>
    %134 = vector.shape_cast %133 : vector<8x32xf32> to vector<1x8x32xf32>
    %135 = arith.addf %0, %134 : vector<1x8x32xf32>
    %c0_44 = arith.constant 0 : index
    %c0_45 = arith.constant 0 : index
    %136 = vector.load %arg9[%c0_44, %c0_45] : memref<1x32xf32, #tpu.memory_space<vmem>>, vector<1x32xf32>
    %c0_46 = arith.constant 0 : index
    %c0_47 = arith.constant 0 : index
    %137 = vector.load %arg10[%c0_46, %c0_47] : memref<1x32xf32, #tpu.memory_space<vmem>>, vector<1x32xf32>
    %cst_48 = arith.constant dense<0.000000e+00> : vector<1x8xf32>
    %138 = vector.multi_reduction <add>, %135, %cst_48 [2] : vector<1x8x32xf32> to vector<1x8xf32>
    %139 = vector.shape_cast %138 : vector<1x8xf32> to vector<1x8x1xf32>
    %cst_49 = arith.constant 3.200000e+01 : f32
    %140 = vector.broadcast %cst_49 : f32 to vector<1x8x1xf32>
    %141 = arith.divf %139, %140 : vector<1x8x1xf32>
    %142 = vector.broadcast %141 : vector<1x8x1xf32> to vector<1x8x32xf32>
    %143 = arith.subf %135, %142 : vector<1x8x32xf32>
    %144 = arith.mulf %143, %143 : vector<1x8x32xf32>
    %cst_50 = arith.constant dense<0.000000e+00> : vector<1x8xf32>
    %145 = vector.multi_reduction <add>, %144, %cst_50 [2] : vector<1x8x32xf32> to vector<1x8xf32>
    %146 = vector.shape_cast %145 : vector<1x8xf32> to vector<1x8x1xf32>
    %cst_51 = arith.constant 3.200000e+01 : f32
    %147 = vector.broadcast %cst_51 : f32 to vector<1x8x1xf32>
    %148 = arith.divf %146, %147 : vector<1x8x1xf32>
    %149 = vector.broadcast %141 : vector<1x8x1xf32> to vector<1x8x32xf32>
    %150 = arith.subf %135, %149 : vector<1x8x32xf32>
    %cst_52 = arith.constant 9.99999974E-6 : f32
    %151 = vector.broadcast %cst_52 : f32 to vector<1x8x1xf32>
    %152 = arith.addf %148, %151 : vector<1x8x1xf32>
    %153 = math.rsqrt %152 : vector<1x8x1xf32>
    %154 = vector.broadcast %153 : vector<1x8x1xf32> to vector<1x8x32xf32>
    %155 = arith.mulf %150, %154 : vector<1x8x32xf32>
    %156 = vector.shape_cast %136 : vector<1x32xf32> to vector<1x1x32xf32>
    %157 = vector.broadcast %156 : vector<1x1x32xf32> to vector<1x8x32xf32>
    %158 = arith.mulf %155, %157 : vector<1x8x32xf32>
    %159 = vector.shape_cast %137 : vector<1x32xf32> to vector<1x1x32xf32>
    %160 = vector.broadcast %159 : vector<1x1x32xf32> to vector<1x8x32xf32>
    %161 = arith.addf %158, %160 : vector<1x8x32xf32>
    %162 = vector.shape_cast %161 : vector<1x8x32xf32> to vector<8x32xf32>
    %163 = arith.truncf %162 : vector<8x32xf32> to vector<8x32xbf16>
    %cst_53 = arith.constant 0.000000e+00 : f32
    %164 = vector.broadcast %cst_53 : f32 to vector<8x32xf32>
    %c0_54 = arith.constant 0 : index
    %c0_55 = arith.constant 0 : index
    %165 = vector.load %arg11[%c0_54, %c0_55] : memref<32x64xbf16, #tpu.memory_space<vmem>>, vector<32x64xbf16>
    %cst_56 = arith.constant dense<0.000000e+00> : vector<8x64xf32>
    %166 = tpu.matmul %163, %165, %cst_56 {dimension_numbers = #tpu.dot_dimension_numbers<[1], [0], [0], [1], [0, 0, 1, 1], [], []>} : vector<8x32xbf16>, vector<32x64xbf16>, vector<8x64xf32> -> vector<8x64xf32>
    %c0_57 = arith.constant 0 : index
    %c0_58 = arith.constant 0 : index
    %167 = vector.load %arg12[%c0_57, %c0_58] : memref<1x64xf32, #tpu.memory_space<vmem>>, vector<1x64xf32>
    %168 = vector.broadcast %167 : vector<1x64xf32> to vector<8x64xf32>
    %169 = arith.addf %166, %168 : vector<8x64xf32>
    %cst_59 = arith.constant 0.000000e+00 : f32
    %170 = vector.broadcast %cst_59 : f32 to vector<8x64xf32>
    %171 = arith.maximumf %169, %170 : vector<8x64xf32>
    %172 = arith.truncf %171 : vector<8x64xf32> to vector<8x64xbf16>
    %c0_60 = arith.constant 0 : index
    %c0_61 = arith.constant 0 : index
    %173 = vector.load %arg13[%c0_60, %c0_61] : memref<64x32xbf16, #tpu.memory_space<vmem>>, vector<64x32xbf16>
    %cst_62 = arith.constant dense<0.000000e+00> : vector<8x32xf32>
    %174 = tpu.matmul %172, %173, %cst_62 {dimension_numbers = #tpu.dot_dimension_numbers<[1], [0], [0], [1], [0, 0, 1, 1], [], []>} : vector<8x64xbf16>, vector<64x32xbf16>, vector<8x32xf32> -> vector<8x32xf32>
    %175 = arith.addf %164, %174 : vector<8x32xf32>
    %c0_63 = arith.constant 0 : index
    %c0_64 = arith.constant 0 : index
    %176 = vector.load %arg14[%c0_63, %c0_64] : memref<1x32xf32, #tpu.memory_space<vmem>>, vector<1x32xf32>
    %177 = vector.broadcast %176 : vector<1x32xf32> to vector<8x32xf32>
    %178 = arith.addf %175, %177 : vector<8x32xf32>
    %179 = vector.shape_cast %178 : vector<8x32xf32> to vector<1x8x32xf32>
    %180 = arith.addf %135, %179 : vector<1x8x32xf32>
    %c0_65 = arith.constant 0 : index
    %c0_66 = arith.constant 0 : index
    %c0_67 = arith.constant 0 : index
    %181 = vector.load %arg15[%c0_65, %c0_66, %c0_67] : memref<1x8x32xf32, #tpu.memory_space<vmem>>, vector<1x8x32xf32>
    tpu.vector_store %arg15[%c0_65, %c0_66, %c0_67], %180 {strides = array<i32>} : memref<1x8x32xf32, #tpu.memory_space<vmem>>, vector<1x8x32xf32>,
    return
  }
  func.func @transform_0(%arg0: i32) -> (i32, i32, i32) {
    %c0_i32 = arith.constant 0 : i32
    %c0_i32_0 = arith.constant 0 : i32
    %c0_i32_1 = arith.constant 0 : i32
    return %arg0, %c0_i32, %c0_i32_0 : i32, i32, i32
  }
  func.func @transform_1(%arg0: i32) -> (i32, i32, i32) {
    %c0_i32 = arith.constant 0 : i32
    %c0_i32_0 = arith.constant 0 : i32
    %c0_i32_1 = arith.constant 0 : i32
    return %arg0, %c0_i32, %c0_i32_0 : i32, i32, i32
  }
  func.func @transform_2(%arg0: i32) -> (i32, i32) {
    %c0_i32 = arith.constant 0 : i32
    %c0_i32_0 = arith.constant 0 : i32
    %c0_i32_1 = arith.constant 0 : i32
    return %c0_i32, %c0_i32_0 : i32, i32
  }
  func.func @transform_3(%arg0: i32) -> (i32, i32) {
    %c0_i32 = arith.constant 0 : i32
    %c0_i32_0 = arith.constant 0 : i32
    %c0_i32_1 = arith.constant 0 : i32
    return %c0_i32, %c0_i32_0 : i32, i32
  }
  func.func @transform_4(%arg0: i32) -> (i32, i32) {
    %c0_i32 = arith.constant 0 : i32
    %c0_i32_0 = arith.constant 0 : i32
    %c0_i32_1 = arith.constant 0 : i32
    return %c0_i32, %c0_i32_0 : i32, i32
  }
  func.func @transform_5(%arg0: i32) -> (i32, i32) {
    %c0_i32 = arith.constant 0 : i32
    %c0_i32_0 = arith.constant 0 : i32
    %c0_i32_1 = arith.constant 0 : i32
    return %c0_i32, %c0_i32_0 : i32, i32
  }
  func.func @transform_6(%arg0: i32) -> (i32, i32) {
    %c0_i32 = arith.constant 0 : i32
    %c0_i32_0 = arith.constant 0 : i32
    %c0_i32_1 = arith.constant 0 : i32
    return %c0_i32, %c0_i32_0 : i32, i32
  }
  func.func @transform_7(%arg0: i32) -> (i32, i32) {
    %c0_i32 = arith.constant 0 : i32
    %c0_i32_0 = arith.constant 0 : i32
    %c0_i32_1 = arith.constant 0 : i32
    return %c0_i32, %c0_i32_0 : i32, i32
  }
  func.func @transform_8(%arg0: i32) -> (i32, i32) {
    %c0_i32 = arith.constant 0 : i32
    %c0_i32_0 = arith.constant 0 : i32
    %c0_i32_1 = arith.constant 0 : i32
    return %c0_i32, %c0_i32_0 : i32, i32
  }
  func.func @transform_9(%arg0: i32) -> (i32, i32) {
    %c0_i32 = arith.constant 0 : i32
    %c0_i32_0 = arith.constant 0 : i32
    %c0_i32_1 = arith.constant 0 : i32
    return %c0_i32, %c0_i32_0 : i32, i32
  }
  func.func @transform_10(%arg0: i32) -> (i32, i32) {
    %c0_i32 = arith.constant 0 : i32
    %c0_i32_0 = arith.constant 0 : i32
    %c0_i32_1 = arith.constant 0 : i32
    return %c0_i32, %c0_i32_0 : i32, i32
  }
  func.func @transform_11(%arg0: i32) -> (i32, i32) {
    %c0_i32 = arith.constant 0 : i32
    %c0_i32_0 = arith.constant 0 : i32
    %c0_i32_1 = arith.constant 0 : i32
    return %c0_i32, %c0_i32_0 : i32, i32
  }
  func.func @transform_12(%arg0: i32) -> (i32, i32) {
    %c0_i32 = arith.constant 0 : i32
    %c0_i32_0 = arith.constant 0 : i32
    %c0_i32_1 = arith.constant 0 : i32
    return %c0_i32, %c0_i32_0 : i32, i32
  }
  func.func @transform_13(%arg0: i32) -> (i32, i32) {
    %c0_i32 = arith.constant 0 : i32
    %c0_i32_0 = arith.constant 0 : i32
    %c0_i32_1 = arith.constant 0 : i32
    return %c0_i32, %c0_i32_0 : i32, i32
  }
  func.func @transform_14(%arg0: i32) -> (i32, i32, i32) {
    %c0_i32 = arith.constant 0 : i32
    %c0_i32_0 = arith.constant 0 : i32
    %c0_i32_1 = arith.constant 0 : i32
    return %arg0, %c0_i32, %c0_i32_0 : i32, i32, i32
  }
}

</mosaic_0001>

<llo_original>
// kernel: tpu_custom_call.1
$region0: #{tpu_custom_call.1}
  #allocation0 [shape = 'u32[]', space=smem, size = 0x4, offset = 0x4, fixed_abs, tag = 'smem constant byte address 0x4 - core index']
  #allocation1 [shape = 'u32[72,128]{1,0:T(1,128)}', space=vmem, size = 0x9000, scoped, tag = 'internal scratch']
  %s0 = inlined_call_operand.vmem [shape: f32[2,8,32], index: 0, kind: input, shape index: {}]
  %s1 = inlined_call_operand.hbm [shape: f32[2,1,8], index: 1, kind: input, shape index: {}]
  %s2 = inlined_call_operand.vmem [shape: f32[1,32], index: 2, kind: input, shape index: {}]
  %s3 = inlined_call_operand.vmem [shape: f32[1,32], index: 3, kind: input, shape index: {}]
  %s4 = inlined_call_operand.vmem [shape: bf16[32,96], index: 4, kind: input, shape index: {}]
  %s5 = inlined_call_operand.vmem [shape: f32[1,96], index: 5, kind: input, shape index: {}]
  %s6 = inlined_call_operand.vmem [shape: bf16[32,32], index: 6, kind: input, shape index: {}]
  %s7 = inlined_call_operand.vmem [shape: f32[1,32], index: 7, kind: input, shape index: {}]
  %s8 = inlined_call_operand.vmem [shape: f32[1,32], index: 8, kind: input, shape index: {}]
  %s9 = inlined_call_operand.vmem [shape: f32[1,32], index: 9, kind: input, shape index: {}]
  %s10 = inlined_call_operand.hbm [shape: bf16[32,64], index: 10, kind: input, shape index: {}]
  %s11 = inlined_call_operand.vmem [shape: f32[1,64], index: 11, kind: input, shape index: {}]
  %s12 = inlined_call_operand.vmem [shape: bf16[64,32], index: 12, kind: input, shape index: {}]
  %s13 = inlined_call_operand.vmem [shape: f32[1,32], index: 13, kind: input, shape index: {}]
  %s14 = inlined_call_operand.hbm [shape: f32[2,8,32], index: 14, kind: output, shape index: {}]
  %s15 = sld [smem:[#allocation0]]
  $region97: #{tpu_custom_call.1} parent=0
    _
  %s17 = ssub.s32 1, %s15
  %s18 = scalar_select 0, %s17, %s15
  $region1: #{tpu_custom_call.1} parent=0
    #allocation2 [shape = 'u8[1024]{0}', space=vmem, size = 0x400, scoped, tag = 'input window, operand 1']
    #allocation3 [shape = 's32[2]{0}', space=sflag, size = 0x8, scoped, tag = 'scoped memory for tpu_custom_call.1']
    #allocation4 [shape = 's32[2]{0}', space=sflag, size = 0x8, scoped, tag = 'scoped memory for tpu_custom_call.1']
    #allocation5 [shape = 'u8[8192]{0}', space=vmem, size = 0x2000, scoped, tag = 'input window, operand 10, single buffered']
    #allocation6 [shape = 's32[1]{0}', space=sflag, size = 0x4, scoped, tag = 'scoped memory for tpu_custom_call.1']
    #allocation7 [shape = 'u8[8192]{0}', space=vmem, size = 0x2000, scoped, tag = 'output window, operand 0']
    %19 = vsyncpa [#allocation3], 0
    %s20 = scalar_lea.sflag [#allocation3], 1
    %21 = vsyncpa %s20, 0
    %22 = vsyncpa [#allocation6], 0
    %23 = vsyncpa [#allocation4], 0
    %s24 = scalar_lea.sflag [#allocation4], 1
    %25 = vsyncpa %s24, 0
    loop: start=0, step=1, limit=4
    $region2: #{tpu_custom_call.1} parent=1 // loop_pre_header
      _
    $region3: #{tpu_custom_call.1} parent=1 // loop_header
      %s27 = sphi 0, %s31
      %p28 = scmp.ge.s32.totalorder %s27, 4
      %s37 = sphi 0, %s39
      %s40 = sphi 0, %s37
      %s41 = sphi 0, %s40
      %s57 = sphi 0, %s41
      %s63 = sphi 0, %s65
      %s66 = sphi 0, %s63
      %s67 = sphi 0, %s66
      %s83 = sphi 0, %s67
      %s87 = sphi 0, %s87
      %s89 = sphi 0, %s87
      %s90 = sphi 0, %s89
      %s104 = sphi 0, %s90
      %s108 = sphi 0, %s108
      %s110 = sphi 0, %s108
      %s111 = sphi 0, %s110
      %s125 = sphi 0, %s111
      %s129 = sphi 0, %s129
      %s131 = sphi 0, %s129
      %s132 = sphi 0, %s131
      %s146 = sphi 0, %s132
      %s150 = sphi 0, %s150
      %s152 = sphi 0, %s150
      %s153 = sphi 0, %s152
      %s167 = sphi 0, %s153
      %s171 = sphi 0, %s171
      %s173 = sphi 0, %s171
      %s174 = sphi 0, %s173
      %s188 = sphi 0, %s174
      %s192 = sphi 0, %s192
      %s194 = sphi 0, %s192
      %s195 = sphi 0, %s194
      %s209 = sphi 0, %s195
      %s213 = sphi 0, %s213
      %s215 = sphi 0, %s213
      %s216 = sphi 0, %s215
      %s230 = sphi 0, %s216
      %s234 = sphi 0, %s234
      %s236 = sphi 0, %s234
      %s237 = sphi 0, %s236
      %s251 = sphi 0, %s237
      %s255 = sphi 0, %s255
      %s257 = sphi 0, %s255
      %s258 = sphi 0, %s257
      %s272 = sphi 0, %s258
      %s276 = sphi 0, %s276
      %s278 = sphi 0, %s276
      %s279 = sphi 0, %s278
      %s293 = sphi 0, %s279
      %s297 = sphi 0, %s297
      %s299 = sphi 0, %s297
      %s300 = sphi 0, %s299
      %s314 = sphi 0, %s300
      %s318 = sphi 0, %s318
      %s320 = sphi 0, %s318
      %s321 = sphi 0, %s320
      %s335 = sphi 0, %s321
      %s341 = sphi 0, %s343
      %s344 = sphi 0, %s341
      %s345 = sphi 0, %s344
      %s361 = sphi 0, %s345
    $region4: #{tpu_custom_call.1} parent=1 // loop_header_branch
      %30 = sbr.rel (%p28) target = $region8
    $region5: #{tpu_custom_call.1} parent=1 // loop_body
      %s32 = ssub.s32 %s27, 1
      %s33 = ssub.s32 %s27, 2
      %s34 = sadd.s32 %s27, 1
      %s35 = ssub.s32 %s27, %s34
      %p36 = scmp.eq.s32.totalorder %s35, 0
      %s38 = sadd.s32 %s37, 1
      %s39 = scalar_select %p36, %s37, %s38
      %p42 = pneg %p36
      %p43 = scmp.eq.s32.totalorder %s27, 1
      %p44 = por %p42, %p43
      %p45 = scmp.ne.s32.totalorder %s37, %s40
      %p46 = scmp.eq.s32.totalorder %s27, 0
      %p47 = por %p45, %p46
      %p48 = scmp.ne.s32.totalorder %s37, %s40
      %p49 = scmp.eq.s32.totalorder %s32, 1
      %p50 = por %p48, %p49
      %p51 = scmp.ne.s32.totalorder %s40, %s41
      %p52 = scmp.eq.s32.totalorder %s32, 0
      %p53 = por %p51, %p52
      %p54 = scmp.ne.s32.totalorder %s40, %s41
      %p55 = scmp.eq.s32.totalorder %s33, 1
      %p56 = por %p54, %p55
      %p58 = scmp.ne.s32.totalorder %s41, %s57
      %p59 = scmp.eq.s32.totalorder %s33, 0
      %p60 = por %p58, %p59
      %s61 = ssub.s32 %s27, %s34
      %p62 = scmp.eq.s32.totalorder %s61, 0
      %s64 = sadd.s32 %s63, 1
      %s65 = scalar_select %p62, %s63, %s64
      %p68 = pneg %p62
      %p69 = scmp.eq.s32.totalorder %s27, 1
      %p70 = por %p68, %p69
      %p71 = scmp.ne.s32.totalorder %s63, %s66
      %p72 = scmp.eq.s32.totalorder %s27, 0
      %p73 = por %p71, %p72
      %p74 = scmp.ne.s32.totalorder %s63, %s66
      %p75 = scmp.eq.s32.totalorder %s32, 1
      %p76 = por %p74, %p75
      %p77 = scmp.ne.s32.totalorder %s66, %s67
      %p78 = scmp.eq.s32.totalorder %s32, 0
      %p79 = por %p77, %p78
      %p80 = scmp.ne.s32.totalorder %s66, %s67
      %p81 = scmp.eq.s32.totalorder %s33, 1
      %p82 = por %p80, %p81
      %p84 = scmp.ne.s32.totalorder %s67, %s83
      %p85 = scmp.eq.s32.totalorder %s33, 0
      %p86 = por %p84, %p85
      %s88 = sadd.s32 %s87, 1
      %p91 = scmp.eq.s32.totalorder %s27, 1
      %p92 = scmp.ne.s32.totalorder %s87, %s89
      %p93 = scmp.eq.s32.totalorder %s27, 0
      %p94 = por %p92, %p93
      %p95 = scmp.ne.s32.totalorder %s87, %s89
      %p96 = scmp.eq.s32.totalorder %s32, 1
      %p97 = por %p95, %p96
      %p98 = scmp.ne.s32.totalorder %s89, %s90
      %p99 = scmp.eq.s32.totalorder %s32, 0
      %p100 = por %p98, %p99
      %p101 = scmp.ne.s32.totalorder %s89, %s90
      %p102 = scmp.eq.s32.totalorder %s33, 1
      %p103 = por %p101, %p102
      %p105 = scmp.ne.s32.totalorder %s90, %s104
      %p106 = scmp.eq.s32.totalorder %s33, 0
      %p107 = por %p105, %p106
      %s109 = sadd.s32 %s108, 1
      %p112 = scmp.eq.s32.totalorder %s27, 1
      %p113 = scmp.ne.s32.totalorder %s108, %s110
      %p114 = scmp.eq.s32.totalorder %s27, 0
      %p115 = por %p113, %p114
      %p116 = scmp.ne.s32.totalorder %s108, %s110
      %p117 = scmp.eq.s32.totalorder %s32, 1
      %p118 = por %p116, %p117
      %p119 = scmp.ne.s32.totalorder %s110, %s111
      %p120 = scmp.eq.s32.totalorder %s32, 0
      %p121 = por %p119, %p120
      %p122 = scmp.ne.s32.totalorder %s110, %s111
      %p123 = scmp.eq.s32.totalorder %s33, 1
      %p124 = por %p122, %p123
      %p126 = scmp.ne.s32.totalorder %s111, %s125
      %p127 = scmp.eq.s32.totalorder %s33, 0
      %p128 = por %p126, %p127
      %s130 = sadd.s32 %s129, 1
      %p133 = scmp.eq.s32.totalorder %s27, 1
      %p134 = scmp.ne.s32.totalorder %s129, %s131
      %p135 = scmp.eq.s32.totalorder %s27, 0
      %p136 = por %p134, %p135
      %p137 = scmp.ne.s32.totalorder %s129, %s131
      %p138 = scmp.eq.s32.totalorder %s32, 1
      %p139 = por %p137, %p138
      %p140 = scmp.ne.s32.totalorder %s131, %s132
      %p141 = scmp.eq.s32.totalorder %s32, 0
      %p142 = por %p140, %p141
      %p143 = scmp.ne.s32.totalorder %s131, %s132
      %p144 = scmp.eq.s32.totalorder %s33, 1
      %p145 = por %p143, %p144
      %p147 = scmp.ne.s32.totalorder %s132, %s146
      %p148 = scmp.eq.s32.totalorder %s33, 0
      %p149 = por %p147, %p148
      %s151 = sadd.s32 %s150, 1
      %p154 = scmp.eq.s32.totalorder %s27, 1
      %p155 = scmp.ne.s32.totalorder %s150, %s152
      %p156 = scmp.eq.s32.totalorder %s27, 0
      %p157 = por %p155, %p156
      %p158 = scmp.ne.s32.totalorder %s150, %s152
      %p159 = scmp.eq.s32.totalorder %s32, 1
      %p160 = por %p158, %p159
      %p161 = scmp.ne.s32.totalorder %s152, %s153
      %p162 = scmp.eq.s32.totalorder %s32, 0
      %p163 = por %p161, %p162
      %p164 = scmp.ne.s32.totalorder %s152, %s153
      %p165 = scmp.eq.s32.totalorder %s33, 1
      %p166 = por %p164, %p165
      %p168 = scmp.ne.s32.totalorder %s153, %s167
      %p169 = scmp.eq.s32.totalorder %s33, 0
      %p170 = por %p168, %p169
      %s172 = sadd.s32 %s171, 1
      %p175 = scmp.eq.s32.totalorder %s27, 1
      %p176 = scmp.ne.s32.totalorder %s171, %s173
      %p177 = scmp.eq.s32.totalorder %s27, 0
      %p178 = por %p176, %p177
      %p179 = scmp.ne.s32.totalorder %s171, %s173
      %p180 = scmp.eq.s32.totalorder %s32, 1
      %p181 = por %p179, %p180
      %p182 = scmp.ne.s32.totalorder %s173, %s174
      %p183 = scmp.eq.s32.totalorder %s32, 0
      %p184 = por %p182, %p183
      %p185 = scmp.ne.s32.totalorder %s173, %s174
      %p186 = scmp.eq.s32.totalorder %s33, 1
      %p187 = por %p185, %p186
      %p189 = scmp.ne.s32.totalorder %s174, %s188
      %p190 = scmp.eq.s32.totalorder %s33, 0
      %p191 = por %p189, %p190
      %s193 = sadd.s32 %s192, 1
      %p196 = scmp.eq.s32.totalorder %s27, 1
      %p197 = scmp.ne.s32.totalorder %s192, %s194
      %p198 = scmp.eq.s32.totalorder %s27, 0
      %p199 = por %p197, %p198
      %p200 = scmp.ne.s32.totalorder %s192, %s194
      %p201 = scmp.eq.s32.totalorder %s32, 1
      %p202 = por %p200, %p201
      %p203 = scmp.ne.s32.totalorder %s194, %s195
      %p204 = scmp.eq.s32.totalorder %s32, 0
      %p205 = por %p203, %p204
      %p206 = scmp.ne.s32.totalorder %s194, %s195
      %p207 = scmp.eq.s32.totalorder %s33, 1
      %p208 = por %p206, %p207
      %p210 = scmp.ne.s32.totalorder %s195, %s209
      %p211 = scmp.eq.s32.totalorder %s33, 0
      %p212 = por %p210, %p211
      %s214 = sadd.s32 %s213, 1
      %p217 = scmp.eq.s32.totalorder %s27, 1
      %p218 = scmp.ne.s32.totalorder %s213, %s215
      %p219 = scmp.eq.s32.totalorder %s27, 0
      %p220 = por %p218, %p219
      %p221 = scmp.ne.s32.totalorder %s213, %s215
      %p222 = scmp.eq.s32.totalorder %s32, 1
      %p223 = por %p221, %p222
      %p224 = scmp.ne.s32.totalorder %s215, %s216
      %p225 = scmp.eq.s32.totalorder %s32, 0
      %p226 = por %p224, %p225
      %p227 = scmp.ne.s32.totalorder %s215, %s216
      %p228 = scmp.eq.s32.totalorder %s33, 1
      %p229 = por %p227, %p228
      %p231 = scmp.ne.s32.totalorder %s216, %s230
      %p232 = scmp.eq.s32.totalorder %s33, 0
      %p233 = por %p231, %p232
      %s235 = sadd.s32 %s234, 1
      %p238 = scmp.eq.s32.totalorder %s27, 1
      %p239 = scmp.ne.s32.totalorder %s234, %s236
      %p240 = scmp.eq.s32.totalorder %s27, 0
      %p241 = por %p239, %p240
      %p242 = scmp.ne.s32.totalorder %s234, %s236
      %p243 = scmp.eq.s32.totalorder %s32, 1
      %p244 = por %p242, %p243
      %p245 = scmp.ne.s32.totalorder %s236, %s237
      %p246 = scmp.eq.s32.totalorder %s32, 0
      %p247 = por %p245, %p246
      %p248 = scmp.ne.s32.totalorder %s236, %s237
      %p249 = scmp.eq.s32.totalorder %s33, 1
      %p250 = por %p248, %p249
      %p252 = scmp.ne.s32.totalorder %s237, %s251
      %p253 = scmp.eq.s32.totalorder %s33, 0
      %p254 = por %p252, %p253
      %s256 = sadd.s32 %s255, 1
      %p259 = scmp.eq.s32.totalorder %s27, 1
      %p260 = scmp.ne.s32.totalorder %s255, %s257
      %p261 = scmp.eq.s32.totalorder %s27, 0
      %p262 = por %p260, %p261
      %p263 = scmp.ne.s32.totalorder %s255, %s257
      %p264 = scmp.eq.s32.totalorder %s32, 1
      %p265 = por %p263, %p264
      %p266 = scmp.ne.s32.totalorder %s257, %s258
      %p267 = scmp.eq.s32.totalorder %s32, 0
      %p268 = por %p266, %p267
      %p269 = scmp.ne.s32.totalorder %s257, %s258
      %p270 = scmp.eq.s32.totalorder %s33, 1
      %p271 = por %p269, %p270
      %p273 = scmp.ne.s32.totalorder %s258, %s272
      %p274 = scmp.eq.s32.totalorder %s33, 0
      %p275 = por %p273, %p274
      %s277 = sadd.s32 %s276, 1
      %p280 = scmp.eq.s32.totalorder %s27, 1
      %p281 = scmp.ne.s32.totalorder %s276, %s278
      %p282 = scmp.eq.s32.totalorder %s27, 0
      %p283 = por %p281, %p282
      %p284 = scmp.ne.s32.totalorder %s276, %s278
      %p285 = scmp.eq.s32.totalorder %s32, 1
      %p286 = por %p284, %p285
      %p287 = scmp.ne.s32.totalorder %s278, %s279
      %p288 = scmp.eq.s32.totalorder %s32, 0
      %p289 = por %p287, %p288
      %p290 = scmp.ne.s32.totalorder %s278, %s279
      %p291 = scmp.eq.s32.totalorder %s33, 1
      %p292 = por %p290, %p291
      %p294 = scmp.ne.s32.totalorder %s279, %s293
      %p295 = scmp.eq.s32.totalorder %s33, 0
      %p296 = por %p294, %p295
      %s298 = sadd.s32 %s297, 1
      %p301 = scmp.eq.s32.totalorder %s27, 1
      %p302 = scmp.ne.s32.totalorder %s297, %s299
      %p303 = scmp.eq.s32.totalorder %s27, 0
      %p304 = por %p302, %p303
      %p305 = scmp.ne.s32.totalorder %s297, %s299
      %p306 = scmp.eq.s32.totalorder %s32, 1
      %p307 = por %p305, %p306
      %p308 = scmp.ne.s32.totalorder %s299, %s300
      %p309 = scmp.eq.s32.totalorder %s32, 0
      %p310 = por %p308, %p309
      %p311 = scmp.ne.s32.totalorder %s299, %s300
      %p312 = scmp.eq.s32.totalorder %s33, 1
      %p313 = por %p311, %p312
      %p315 = scmp.ne.s32.totalorder %s300, %s314
      %p316 = scmp.eq.s32.totalorder %s33, 0
      %p317 = por %p315, %p316
      %s319 = sadd.s32 %s318, 1
      %p322 = scmp.eq.s32.totalorder %s27, 1
      %p323 = scmp.ne.s32.totalorder %s318, %s320
      %p324 = scmp.eq.s32.totalorder %s27, 0
      %p325 = por %p323, %p324
      %p326 = scmp.ne.s32.totalorder %s318, %s320
      %p327 = scmp.eq.s32.totalorder %s32, 1
      %p328 = por %p326, %p327
      %p329 = scmp.ne.s32.totalorder %s320, %s321
      %p330 = scmp.eq.s32.totalorder %s32, 0
      %p331 = por %p329, %p330
      %p332 = scmp.ne.s32.totalorder %s320, %s321
      %p333 = scmp.eq.s32.totalorder %s33, 1
      %p334 = por %p332, %p333
      %p336 = scmp.ne.s32.totalorder %s321, %s335
      %p337 = scmp.eq.s32.totalorder %s33, 0
      %p338 = por %p336, %p337
      %s339 = ssub.s32 %s27, %s34
      %p340 = scmp.eq.s32.totalorder %s339, 0
      %s342 = sadd.s32 %s341, 1
      %s343 = scalar_select %p340, %s341, %s342
      %p346 = pneg %p340
      %p347 = scmp.eq.s32.totalorder %s27, 1
      %p348 = por %p346, %p347
      %p349 = scmp.ne.s32.totalorder %s341, %s344
      %p350 = scmp.eq.s32.totalorder %s27, 0
      %p351 = por %p349, %p350
      %p352 = scmp.ne.s32.totalorder %s341, %s344
      %p353 = scmp.eq.s32.totalorder %s32, 1
      %p354 = por %p352, %p353
      %p355 = scmp.ne.s32.totalorder %s344, %s345
      %p356 = scmp.eq.s32.totalorder %s32, 0
      %p357 = por %p355, %p356
      %p358 = scmp.ne.s32.totalorder %s344, %s345
      %p359 = scmp.eq.s32.totalorder %s33, 1
      %p360 = por %p358, %p359
      %p362 = scmp.ne.s32.totalorder %s345, %s361
      %p363 = scmp.eq.s32.totalorder %s33, 0
      %p364 = por %p362, %p363
      %p365 = scmp.le.s32.totalorder 1, %s27
      %p366 = scmp.lt.s32.totalorder %s27, 3
      %p367 = pnand %p365, %p366
      %p368 = pneg %p367
      // Predicated region
      $region9: #{tpu_custom_call.1} parent=5 // pred_check
        _
      $region10: #{tpu_custom_call.1} parent=5 // pred_check_branch
        %370 = sbr.rel (%p367) target = $region12
      $region11: #{tpu_custom_call.1} parent=5 // pred_region
        %s371 = ssub.s32 %s27, 1
        // Predicated region
        $region13: #{tpu_custom_call.1} parent=11 // pred_check
          %p372 = pneg %p100
        $region14: #{tpu_custom_call.1} parent=11 // pred_check_branch
          %374 = sbr.rel (%p372) target = $region16
        $region15: #{tpu_custom_call.1} parent=11 // pred_region
          _
        $region16: #{tpu_custom_call.1} parent=11 // pred_fallthru
          _
        // Predicated region
        $region17: #{tpu_custom_call.1} parent=11 // pred_check
          %p375 = pneg %p121
        $region18: #{tpu_custom_call.1} parent=11 // pred_check_branch
          %377 = sbr.rel (%p375) target = $region20
        $region19: #{tpu_custom_call.1} parent=11 // pred_region
          _
        $region20: #{tpu_custom_call.1} parent=11 // pred_fallthru
          _
        // Predicated region
        $region21: #{tpu_custom_call.1} parent=11 // pred_check
          %p378 = pneg %p142
        $region22: #{tpu_custom_call.1} parent=11 // pred_check_branch
          %380 = sbr.rel (%p378) target = $region24
        $region23: #{tpu_custom_call.1} parent=11 // pred_region
          _
        $region24: #{tpu_custom_call.1} parent=11 // pred_fallthru
          _
        // Predicated region
        $region25: #{tpu_custom_call.1} parent=11 // pred_check
          %p381 = pneg %p163
        $region26: #{tpu_custom_call.1} parent=11 // pred_check_branch
          %383 = sbr.rel (%p381) target = $region28
        $region27: #{tpu_custom_call.1} parent=11 // pred_region
          _
        $region28: #{tpu_custom_call.1} parent=11 // pred_fallthru
          _
        // Predicated region
        $region29: #{tpu_custom_call.1} parent=11 // pred_check
          %p384 = pneg %p184
        $region30: #{tpu_custom_call.1} parent=11 // pred_check_branch
          %386 = sbr.rel (%p384) target = $region32
        $region31: #{tpu_custom_call.1} parent=11 // pred_region
          _
        $region32: #{tpu_custom_call.1} parent=11 // pred_fallthru
          _
        // Predicated region
        $region33: #{tpu_custom_call.1} parent=11 // pred_check
          %p387 = pneg %p205
        $region34: #{tpu_custom_call.1} parent=11 // pred_check_branch
          %389 = sbr.rel (%p387) target = $region36
        $region35: #{tpu_custom_call.1} parent=11 // pred_region
          _
        $region36: #{tpu_custom_call.1} parent=11 // pred_fallthru
          _
        // Predicated region
        $region37: #{tpu_custom_call.1} parent=11 // pred_check
          %p390 = pneg %p226
        $region38: #{tpu_custom_call.1} parent=11 // pred_check_branch
          %392 = sbr.rel (%p390) target = $region40
        $region39: #{tpu_custom_call.1} parent=11 // pred_region
          _
        $region40: #{tpu_custom_call.1} parent=11 // pred_fallthru
          _
        // Predicated region
        $region41: #{tpu_custom_call.1} parent=11 // pred_check
          %p393 = pneg %p247
        $region42: #{tpu_custom_call.1} parent=11 // pred_check_branch
          %395 = sbr.rel (%p393) target = $region44
        $region43: #{tpu_custom_call.1} parent=11 // pred_region
          _
        $region44: #{tpu_custom_call.1} parent=11 // pred_fallthru
          _
        // Predicated region
        $region45: #{tpu_custom_call.1} parent=11 // pred_check
          %p396 = pneg %p268
        $region46: #{tpu_custom_call.1} parent=11 // pred_check_branch
          %398 = sbr.rel (%p396) target = $region48
        $region47: #{tpu_custom_call.1} parent=11 // pred_region
          %400 = vsyncadd [#allocation6], 0
          %s401 = sshll.u32 %s10, 4
          %s402 = int_to_ptr.hbm [resolvable:$true] %s401
          %s403 = sshll.u32 [#allocation5], 4
          %s404 = int_to_ptr.vmem [resolvable:$true] %s403
          %409 = dma.hbm_to_vmem [thread:$0]  %s402, 256, %s404, [#allocation6], 64, 64, 4
        $region48: #{tpu_custom_call.1} parent=11 // pred_fallthru
          _
        // Predicated region
        $region49: #{tpu_custom_call.1} parent=11 // pred_check
          %p410 = pneg %p289
        $region50: #{tpu_custom_call.1} parent=11 // pred_check_branch
          %412 = sbr.rel (%p410) target = $region52
        $region51: #{tpu_custom_call.1} parent=11 // pred_region
          _
        $region52: #{tpu_custom_call.1} parent=11 // pred_fallthru
          _
        // Predicated region
        $region53: #{tpu_custom_call.1} parent=11 // pred_check
          %p413 = pneg %p310
        $region54: #{tpu_custom_call.1} parent=11 // pred_check_branch
          %415 = sbr.rel (%p413) target = $region56
        $region55: #{tpu_custom_call.1} parent=11 // pred_region
          _
        $region56: #{tpu_custom_call.1} parent=11 // pred_fallthru
          _
        // Predicated region
        $region57: #{tpu_custom_call.1} parent=11 // pred_check
          %p416 = pneg %p331
        $region58: #{tpu_custom_call.1} parent=11 // pred_check_branch
          %418 = sbr.rel (%p416) target = $region60
        $region59: #{tpu_custom_call.1} parent=11 // pred_region
          _
        $region60: #{tpu_custom_call.1} parent=11 // pred_fallthru
          _
      $region12: #{tpu_custom_call.1} parent=5 // pred_fallthru
        _
      %p419 = scmp.lt.s32.totalorder %s27, 2
      // Predicated region
      $region61: #{tpu_custom_call.1} parent=5 // pred_check
        %p420 = pneg %p419
      $region62: #{tpu_custom_call.1} parent=5 // pred_check_branch
        %422 = sbr.rel (%p420) target = $region64
      $region63: #{tpu_custom_call.1} parent=5 // pred_region
        // Predicated region
        $region65: #{tpu_custom_call.1} parent=63 // pred_check
          %p423 = pneg %p47
        $region66: #{tpu_custom_call.1} parent=63 // pred_check_branch
          %425 = sbr.rel (%p423) target = $region68
        $region67: #{tpu_custom_call.1} parent=63 // pred_region
          %p426 = scmp.lt.s32.totalorder %s27, 1
          %s427 = scalar_select %p426, %s27, 1
          %s428 = smul.addr %s427, 8
          %s429 = scalar_lea.vmem %s0, %s428
        $region68: #{tpu_custom_call.1} parent=63 // pred_fallthru
          _
        // Predicated region
        $region69: #{tpu_custom_call.1} parent=63 // pred_check
          %p430 = pneg %p73
        $region70: #{tpu_custom_call.1} parent=63 // pred_check_branch
          %432 = sbr.rel (%p430) target = $region72
        $region71: #{tpu_custom_call.1} parent=63 // pred_region
          %s433 = sand.u32 %s63, 1
          %s434 = scalar_lea.sflag [#allocation3], %s433
          %s435 = sand.u32 %s63, 1
          %s436 = scalar_lea.vmem [#allocation2], %s435
          %438 = vsyncadd %s434, 0
          %s439 = scalar_lea.hbm %s1, %s27
          %s441 = sshll.u32 %s439, 4
          %s442 = int_to_ptr.hbm [resolvable:$true] %s441
          %s443 = sshll.u32 %s436, 4
          %s444 = int_to_ptr.vmem [resolvable:$true] %s443
          %446 = dma.hbm_to_vmem [thread:$0]  %s442, 16, %s444, %s434
        $region72: #{tpu_custom_call.1} parent=63 // pred_fallthru
          _
      $region64: #{tpu_custom_call.1} parent=5 // pred_fallthru
        _
      %p447 = scmp.le.s32.totalorder 1, %s27
      %p448 = scmp.lt.s32.totalorder %s27, 3
      %p449 = pnand %p447, %p448
      %p450 = pneg %p449
      // Predicated region
      $region73: #{tpu_custom_call.1} parent=5 // pred_check
        _
      $region74: #{tpu_custom_call.1} parent=5 // pred_check_branch
        %452 = sbr.rel (%p449) target = $region76
      $region75: #{tpu_custom_call.1} parent=5 // pred_region
        %s453 = ssub.s32 %s27, 1
        %s454 = sand.u32 %s66, 1
        %s455 = scalar_lea.sflag [#allocation3], %s454
        %s456 = sand.u32 %s66, 1
        %s457 = scalar_lea.vmem [#allocation2], %s456
        // Predicated region
        $region77: #{tpu_custom_call.1} parent=75 // pred_check
          %p458 = pneg %p79
        $region78: #{tpu_custom_call.1} parent=75 // pred_check_branch
          %460 = sbr.rel (%p458) target = $region80
        $region79: #{tpu_custom_call.1} parent=75 // pred_region
          %462 = dma.done %s455, 16
        $region80: #{tpu_custom_call.1} parent=75 // pred_fallthru
          _
        // Predicated region
        $region81: #{tpu_custom_call.1} parent=75 // pred_check
          %p463 = pneg %p268
        $region82: #{tpu_custom_call.1} parent=75 // pred_check_branch
          %465 = sbr.rel (%p463) target = $region84
        $region83: #{tpu_custom_call.1} parent=75 // pred_region
          %467 = dma.done [#allocation6], 256
        $region84: #{tpu_custom_call.1} parent=75 // pred_fallthru
          _
        %p468 = scmp.lt.s32.totalorder %s32, 1
        %s469 = scalar_select %p468, %s32, 1
        %s470 = smul.addr %s469, 8
        %s471 = scalar_lea.vmem %s0, %s470
        %p472 = pneg %p53
        %p473 = pneg %p50
        %s474 = sand.u32 %s66, 1
        %s475 = scalar_lea.sflag [#allocation3], %s474
        %s476 = sand.u32 %s66, 1
        %s477 = scalar_lea.vmem [#allocation2], %s476
        %p478 = pneg %p79
        %p479 = pneg %p76
        %p480 = pneg %p100
        %p481 = pneg %p97
        %p482 = pneg %p121
        %p483 = pneg %p118
        %p484 = pneg %p142
        %p485 = pneg %p139
        %p486 = pneg %p163
        %p487 = pneg %p160
        %p488 = pneg %p184
        %p489 = pneg %p181
        %p490 = pneg %p205
        %p491 = pneg %p202
        %p492 = pneg %p226
        %p493 = pneg %p223
        %p494 = pneg %p247
        %p495 = pneg %p244
        %p496 = pneg %p268
        %p497 = pneg %p265
        %p498 = pneg %p289
        %p499 = pneg %p286
        %p500 = pneg %p310
        %p501 = pneg %p307
        %p502 = pneg %p331
        %p503 = pneg %p328
        %p504 = pneg %p357
        %p505 = pneg %p354
        %s506 = sand.u32 %s344, 1
        %s507 = scalar_lea.sflag [#allocation4], %s506
        %s508 = sand.u32 %s344, 1
        %s509 = smul.addr %s508, 8
        %s510 = scalar_lea.vmem [#allocation7], %s509
        %p511 = scmp.lt.s32.totalorder %s32, 1
        %s512 = scalar_select %p511, %s32, 1
        %s513 = smul.addr %s512, 8
        %s514 = scalar_lea.vmem %s0, %s513
        %v516 = vld [vmem:[%s514] sm:$0xff]
        %v517 = vld [vmem:[%s2] sm:$0x1]
        %v518 = vld [vmem:[%s3] sm:$0x1]
        %vm519 = vcmask 261120
        %v520 = vsel %vm519, %v516, 0.0
        %521 = vadd.xlane.f32.xlu0 %v520
        %v522 = vpop.xlane.xlu0 %521
        %v523 = vrcp.pop 32.0
        %v524 = vmul.f32 32.0, %v523
        %v525 = vsub.f32 1.0, %v524
        %v526 = vmul.f32 %v523, %v525
        %v527 = vadd.f32 %v523, %v526
        %vm528 = vweird.f32 %v523
        %v529 = vsel %vm528, %v523, %v527
        %v530 = vmul.f32 %v522, %v529
        %v531 = vsub.f32 %v516, %v530
        %v532 = vmul.f32 %v531, %v531
        %v533 = vsel %vm519, %v532, 0.0
        %534 = vadd.xlane.f32.xlu0 %v533
        %v535 = vpop.xlane.xlu0 %534
        %v536 = vmul.f32 %v535, %v529
        %v537 = vadd.f32 %v536, 1e-05
        %v538 = vrsqrt.pop %v537
        %v539 = vmul.f32 %v538, %v537
        %v540 = vmul.f32 %v539, %v538
        %v541 = vmul.f32 0.5, %v540
        %v542 = vsub.f32 1.5, %v541
        %v543 = vmul.f32 %v538, %v542
        %vm544 = vweird.f32 %v537
        %vm545 = vweird.f32 %v538
        %vm546 = vmor %vm544, %vm545
        %v547 = vsel %vm546, %v538, %v543
        %v548 = vmul.f32 %v531, %v547
        %v550 = vperm.slane %v517, 0
        %v552 = vmul.f32 %v548, %v550
        %v554 = vperm.slane %v518, 0
        %v556 = vadd.f32 %v552, %v554
        %v557 = vpack.c.bf16 %v556, %v556
        %v558 = vld [vmem:[%s4] sm:$0xf]
        %v559 = vld [vmem:[%s4 + $0x4] sm:$0xf]
        %v560 = vld [vmem:[%s4 + $0x8] sm:$0xf]
        %v561 = vld [vmem:[%s4 + $0xc] sm:$0xf]
        %v562 = vld [vmem:[%s5] sm:$0x1]
        %v564 = vperm.slane %v562, 0
        %v570 = vunpack.c.l.b16 %v558
        %v571 = vunpack.c.l.b16 %v559
        %v572 = vunpack.c.l.b16 %v560
        %v573 = vunpack.c.l.b16 %v561
        %v574 = vpack.c.b16 %v571, %v570
        %v575 = vpack.c.b16 %v573, %v572
        %v579 = vsel %vm519, %v557, 0
        %581 = vmatpush.bf16.msra.mxu0 0
        %582 = vmatpush.bf16.msra.mxu0 0
        %583 = vmatpush.bf16.msra.mxu0 0
        %584 = vmatpush.bf16.msra.mxu0 0
        %585 = vmatpush.bf16.msra.mxu0 0
        %586 = vmatpush.bf16.msra.mxu0 0
        %587 = vmatpush.bf16.msra.mxu0 %v575
        %588 = vmatpush.bf16.msra.mxu0 %v574
        %589 = vmatmul.bf16.gmra.mxu0 %v579
        %v590 = vpop.f32.mrf.mxu0
        %v591 = vadd.f32 %v564, %v590
        %v592 = vpop.f32.mrf.mxu0
        %593 = vdwg.mxu0
        %v594 = vpack.c.bf16 %v591, %v591
        %v595 = vld [vmem:[%s457] sm:$0x1]
        %vm596 = vcmp.gt.f32.partialorder %v595, 0.0
        %v598 = vunpack.c.l.b16 %v594
        %v599 = vpack.c.b16 %v598, %v598
        %600 = vrot.lane.b32.xlu0 %v599, 96
        %v601 = vpop.permute.xlu0 %600
        %vm602 = vcmask 64512
        %v604 = vsel %vm602, %v594, 0
        %v607 = vsel %vm602, %v601, 0
        %609 = vmatpush.bf16.xpose.msra.mxu0 0
        %610 = vmatpush.bf16.xpose.msra.mxu0 0
        %611 = vmatpush.bf16.xpose.msra.mxu0 0
        %612 = vmatpush.bf16.xpose.msra.mxu0 0
        %613 = vmatpush.bf16.xpose.msra.mxu0 0
        %614 = vmatpush.bf16.xpose.msra.mxu0 0
        %615 = vmatpush.bf16.xpose.msra.mxu0 0
        %616 = vmatpush.bf16.xpose.msra.mxu0 %v607
        %617 = vmatmul.bf16.gmra.mxu0 %v604
        %v618 = vpop.f32.mrf.mxu0
        %v619 = vadd.f32 0.0, %v618
        %v620 = vpop.f32.mrf.mxu0
        %621 = vdwg.mxu0
        %v622 = vsel %vm596, 1, 0
        %v623 = vperm.slane %v622, 0
        %vm624 = vcmp.eq.s32.totalorder %v623, 1
        %v625 = vsel %vm624, %v619, -1e+09
        %v626 = vsel %vm602, %v625, -inf
        %627 = vmax.xlane.f32.xlu0 %v626
        %v628 = vpop.xlane.xlu0 %627
        %v629 = vsub.f32 %v625, %v628
        %v630 = vmul.f32 %v629, 1.442695
        %v631 = vpow.pop %v630
        %v632 = vsel %vm602, %v631, 0.0
        %633 = vadd.xlane.f32.xlu0 %v632
        %v634 = vpop.xlane.xlu0 %633
        %v635 = vrcp.pop %v634
        %v636 = vmul.f32 %v631, %v635
        %v637 = vpack.c.bf16 %v636, %v636
        %638 = vrot.lane.b32.xlu0 %v599, 64
        %v639 = vpop.permute.xlu0 %638
        %v641 = vsel %vm602, %v637, 0
        %vm643 = vcmask 1043456
        %v645 = vsel %vm643, %v639, 0
        %647 = vmatpush.bf16.msra.mxu0 0
        %648 = vmatpush.bf16.msra.mxu0 0
        %649 = vmatpush.bf16.msra.mxu0 0
        %650 = vmatpush.bf16.msra.mxu0 0
        %651 = vmatpush.bf16.msra.mxu0 0
        %652 = vmatpush.bf16.msra.mxu0 0
        %653 = vmatpush.bf16.msra.mxu0 0
        %654 = vmatpush.bf16.msra.mxu0 %v645
        %655 = vmatmul.bf16.gmra.mxu0 %v641
        %v656 = vpop.f32.mrf.mxu0
        %v657 = vadd.f32 0.0, %v656
        %v658 = vpop.f32.mrf.mxu0
        %659 = vdwg.mxu0
        %660 = vrot.lane.b32.xlu0 %v599, 120
        %v661 = vpop.permute.xlu0 %660
        %662 = vrot.lane.b32.xlu0 %v599, 88
        %v663 = vpop.permute.xlu0 %662
        %v665 = vsel %vm602, %v661, 0
        %v668 = vsel %vm602, %v663, 0
        %670 = vmatpush.bf16.xpose.msra.mxu0 0
        %671 = vmatpush.bf16.xpose.msra.mxu0 0
        %672 = vmatpush.bf16.xpose.msra.mxu0 0
        %673 = vmatpush.bf16.xpose.msra.mxu0 0
        %674 = vmatpush.bf16.xpose.msra.mxu0 0
        %675 = vmatpush.bf16.xpose.msra.mxu0 0
        %676 = vmatpush.bf16.xpose.msra.mxu0 0
        %677 = vmatpush.bf16.xpose.msra.mxu0 %v668
        %678 = vmatmul.bf16.gmra.mxu0 %v665
        %v679 = vpop.f32.mrf.mxu0
        %v680 = vadd.f32 0.0, %v679
        %v681 = vpop.f32.mrf.mxu0
        %682 = vdwg.mxu0
        %v683 = vsel %vm624, %v680, -1e+09
        %v684 = vsel %vm602, %v683, -inf
        %685 = vmax.xlane.f32.xlu0 %v684
        %v686 = vpop.xlane.xlu0 %685
        %v687 = vsub.f32 %v683, %v686
        %v688 = vmul.f32 %v687, 1.442695
        %v689 = vpow.pop %v688
        %v690 = vsel %vm602, %v689, 0.0
        %691 = vadd.xlane.f32.xlu0 %v690
        %v692 = vpop.xlane.xlu0 %691
        %v693 = vrcp.pop %v692
        %v694 = vmul.f32 %v689, %v693
        %v695 = vpack.c.bf16 %v694, %v694
        %696 = vrot.lane.b32.xlu0 %v599, 56
        %v697 = vpop.permute.xlu0 %696
        %v699 = vsel %vm602, %v695, 0
        %v702 = vsel %vm643, %v697, 0
        %704 = vmatpush.bf16.msra.mxu0 0
        %705 = vmatpush.bf16.msra.mxu0 0
        %706 = vmatpush.bf16.msra.mxu0 0
        %707 = vmatpush.bf16.msra.mxu0 0
        %708 = vmatpush.bf16.msra.mxu0 0
        %709 = vmatpush.bf16.msra.mxu0 0
        %710 = vmatpush.bf16.msra.mxu0 0
        %711 = vmatpush.bf16.msra.mxu0 %v702
        %712 = vmatmul.bf16.gmra.mxu0 %v699
        %v713 = vpop.f32.mrf.mxu0
        %v714 = vadd.f32 0.0, %v713
        %v715 = vpop.f32.mrf.mxu0
        %716 = vdwg.mxu0
        %717 = vrot.lane.b32.xlu0 %v599, 112
        %v718 = vpop.permute.xlu0 %717
        %719 = vrot.lane.b32.xlu0 %v599, 80
        %v720 = vpop.permute.xlu0 %719
        %v722 = vsel %vm602, %v718, 0
        %v725 = vsel %vm602, %v720, 0
        %727 = vmatpush.bf16.xpose.msra.mxu0 0
        %728 = vmatpush.bf16.xpose.msra.mxu0 0
        %729 = vmatpush.bf16.xpose.msra.mxu0 0
        %730 = vmatpush.bf16.xpose.msra.mxu0 0
        %731 = vmatpush.bf16.xpose.msra.mxu0 0
        %732 = vmatpush.bf16.xpose.msra.mxu0 0
        %733 = vmatpush.bf16.xpose.msra.mxu0 0
        %734 = vmatpush.bf16.xpose.msra.mxu0 %v725
        %735 = vmatmul.bf16.gmra.mxu0 %v722
        %v736 = vpop.f32.mrf.mxu0
        %v737 = vadd.f32 0.0, %v736
        %v738 = vpop.f32.mrf.mxu0
        %739 = vdwg.mxu0
        %v740 = vsel %vm624, %v737, -1e+09
        %v741 = vsel %vm602, %v740, -inf
        %742 = vmax.xlane.f32.xlu0 %v741
        %v743 = vpop.xlane.xlu0 %742
        %v744 = vsub.f32 %v740, %v743
        %v745 = vmul.f32 %v744, 1.442695
        %v746 = vpow.pop %v745
        %v747 = vsel %vm602, %v746, 0.0
        %748 = vadd.xlane.f32.xlu0 %v747
        %v749 = vpop.xlane.xlu0 %748
        %v750 = vrcp.pop %v749
        %v751 = vmul.f32 %v746, %v750
        %v752 = vpack.c.bf16 %v751, %v751
        %753 = vrot.lane.b32.xlu0 %v599, 48
        %v754 = vpop.permute.xlu0 %753
        %v756 = vsel %vm602, %v752, 0
        %v759 = vsel %vm643, %v754, 0
        %761 = vmatpush.bf16.msra.mxu0 0
        %762 = vmatpush.bf16.msra.mxu0 0
        %763 = vmatpush.bf16.msra.mxu0 0
        %764 = vmatpush.bf16.msra.mxu0 0
        %765 = vmatpush.bf16.msra.mxu0 0
        %766 = vmatpush.bf16.msra.mxu0 0
        %767 = vmatpush.bf16.msra.mxu0 0
        %768 = vmatpush.bf16.msra.mxu0 %v759
        %769 = vmatmul.bf16.gmra.mxu0 %v756
        %v770 = vpop.f32.mrf.mxu0
        %v771 = vadd.f32 0.0, %v770
        %v772 = vpop.f32.mrf.mxu0
        %773 = vdwg.mxu0
        %774 = vrot.lane.b32.xlu0 %v599, 104
        %v775 = vpop.permute.xlu0 %774
        %776 = vrot.lane.b32.xlu0 %v599, 72
        %v777 = vpop.permute.xlu0 %776
        %v779 = vsel %vm602, %v775, 0
        %v782 = vsel %vm602, %v777, 0
        %784 = vmatpush.bf16.xpose.msra.mxu0 0
        %785 = vmatpush.bf16.xpose.msra.mxu0 0
        %786 = vmatpush.bf16.xpose.msra.mxu0 0
        %787 = vmatpush.bf16.xpose.msra.mxu0 0
        %788 = vmatpush.bf16.xpose.msra.mxu0 0
        %789 = vmatpush.bf16.xpose.msra.mxu0 0
        %790 = vmatpush.bf16.xpose.msra.mxu0 0
        %791 = vmatpush.bf16.xpose.msra.mxu0 %v782
        %792 = vmatmul.bf16.gmra.mxu0 %v779
        %v793 = vpop.f32.mrf.mxu0
        %v794 = vadd.f32 0.0, %v793
        %v795 = vpop.f32.mrf.mxu0
        %796 = vdwg.mxu0
        %v797 = vsel %vm624, %v794, -1e+09
        %v798 = vsel %vm602, %v797, -inf
        %799 = vmax.xlane.f32.xlu0 %v798
        %v800 = vpop.xlane.xlu0 %799
        %v801 = vsub.f32 %v797, %v800
        %v802 = vmul.f32 %v801, 1.442695
        %v803 = vpow.pop %v802
        %v804 = vsel %vm602, %v803, 0.0
        %805 = vadd.xlane.f32.xlu0 %v804
        %v806 = vpop.xlane.xlu0 %805
        %v807 = vrcp.pop %v806
        %v808 = vmul.f32 %v803, %v807
        %v809 = vpack.c.bf16 %v808, %v808
        %810 = vrot.lane.b32.xlu0 %v599, 40
        %v811 = vpop.permute.xlu0 %810
        %v813 = vsel %vm602, %v809, 0
        %v816 = vsel %vm643, %v811, 0
        %818 = vmatpush.bf16.msra.mxu0 0
        %819 = vmatpush.bf16.msra.mxu0 0
        %820 = vmatpush.bf16.msra.mxu0 0
        %821 = vmatpush.bf16.msra.mxu0 0
        %822 = vmatpush.bf16.msra.mxu0 0
        %823 = vmatpush.bf16.msra.mxu0 0
        %824 = vmatpush.bf16.msra.mxu0 0
        %825 = vmatpush.bf16.msra.mxu0 %v816
        %826 = vmatmul.bf16.gmra.mxu0 %v813
        %v827 = vpop.f32.mrf.mxu0
        %v828 = vadd.f32 0.0, %v827
        %v829 = vpop.f32.mrf.mxu0
        %830 = vdwg.mxu0
        %832 = vrot.lane.b32.xlu0 %v714, 8
        %v833 = vpop.permute.xlu0 %832
        %836 = vrot.lane.b32.xlu0 %v771, 16
        %v837 = vpop.permute.xlu0 %836
        %840 = vrot.lane.b32.xlu0 %v828, 24
        %v841 = vpop.permute.xlu0 %840
        %v843 = vsel %vm602, %v657, %v833
        %vm844 = vcmask 130048
        %v845 = vsel %vm844, %v843, %v837
        %vm846 = vcmask 195584
        %v847 = vsel %vm846, %v845, %v841
        %v848 = vpack.c.bf16 %v847, %v847
        %v849 = vld [vmem:[%s6] sm:$0xf]
        %v850 = vld [vmem:[%s6 + $0x4] sm:$0xf]
        %v851 = vld [vmem:[%s6 + $0x8] sm:$0xf]
        %v852 = vld [vmem:[%s6 + $0xc] sm:$0xf]
        %v853 = vld [vmem:[%s7] sm:$0x1]
        %v855 = vperm.slane %v853, 0
        %v861 = vunpack.c.l.b16 %v849
        %v862 = vunpack.c.l.b16 %v850
        %v863 = vunpack.c.l.b16 %v851
        %v864 = vunpack.c.l.b16 %v852
        %v865 = vpack.c.b16 %v862, %v861
        %v866 = vpack.c.b16 %v864, %v863
        %v870 = vsel %vm519, %v848, 0
        %872 = vmatpush.bf16.msra.mxu0 0
        %873 = vmatpush.bf16.msra.mxu0 0
        %874 = vmatpush.bf16.msra.mxu0 0
        %875 = vmatpush.bf16.msra.mxu0 0
        %876 = vmatpush.bf16.msra.mxu0 0
        %877 = vmatpush.bf16.msra.mxu0 0
        %878 = vmatpush.bf16.msra.mxu0 %v866
        %879 = vmatpush.bf16.msra.mxu0 %v865
        %880 = vmatmul.bf16.gmra.mxu0 %v870
        %v881 = vpop.f32.mrf.mxu0
        %v882 = vadd.f32 %v855, %v881
        %v883 = vpop.f32.mrf.mxu0
        %884 = vdwg.mxu0
        %v885 = vadd.f32 %v516, %v882
        %v886 = vld [vmem:[%s8] sm:$0x1]
        %v887 = vld [vmem:[%s9] sm:$0x1]
        %v888 = vsel %vm519, %v885, 0.0
        %889 = vadd.xlane.f32.xlu0 %v888
        %v890 = vpop.xlane.xlu0 %889
        %v891 = vmul.f32 %v890, %v529
        %v892 = vsub.f32 %v885, %v891
        %v893 = vmul.f32 %v892, %v892
        %v894 = vsel %vm519, %v893, 0.0
        %895 = vadd.xlane.f32.xlu0 %v894
        %v896 = vpop.xlane.xlu0 %895
        %v897 = vmul.f32 %v896, %v529
        %v898 = vadd.f32 %v897, 1e-05
        %v899 = vrsqrt.pop %v898
        %v900 = vmul.f32 %v899, %v898
        %v901 = vmul.f32 %v900, %v899
        %v902 = vmul.f32 0.5, %v901
        %v903 = vsub.f32 1.5, %v902
        %v904 = vmul.f32 %v899, %v903
        %vm905 = vweird.f32 %v898
        %vm906 = vweird.f32 %v899
        %vm907 = vmor %vm905, %vm906
        %v908 = vsel %vm907, %v899, %v904
        %v909 = vmul.f32 %v892, %v908
        %v911 = vperm.slane %v886, 0
        %v913 = vmul.f32 %v909, %v911
        %v915 = vperm.slane %v887, 0
        %v917 = vadd.f32 %v913, %v915
        %v918 = vpack.c.bf16 %v917, %v917
        %v919 = vld [vmem:[#allocation5] sm:$0xf]
        %v920 = vld [vmem:[#allocation5 + $0x4] sm:$0xf]
        %v921 = vld [vmem:[#allocation5 + $0x8] sm:$0xf]
        %v922 = vld [vmem:[#allocation5 + $0xc] sm:$0xf]
        %v923 = vld [vmem:[%s11] sm:$0x1]
        %v925 = vperm.slane %v923, 0
        %v931 = vunpack.c.l.b16 %v919
        %v932 = vunpack.c.l.b16 %v920
        %v933 = vunpack.c.l.b16 %v921
        %v934 = vunpack.c.l.b16 %v922
        %v935 = vpack.c.b16 %v932, %v931
        %v936 = vpack.c.b16 %v934, %v933
        %v940 = vsel %vm519, %v918, 0
        %942 = vmatpush.bf16.msra.mxu0 0
        %943 = vmatpush.bf16.msra.mxu0 0
        %944 = vmatpush.bf16.msra.mxu0 0
        %945 = vmatpush.bf16.msra.mxu0 0
        %946 = vmatpush.bf16.msra.mxu0 0
        %947 = vmatpush.bf16.msra.mxu0 0
        %948 = vmatpush.bf16.msra.mxu0 %v936
        %949 = vmatpush.bf16.msra.mxu0 %v935
        %950 = vmatmul.bf16.gmra.mxu0 %v940
        %v951 = vpop.f32.mrf.mxu0
        %v952 = vadd.f32 %v925, %v951
        %v953 = vpop.f32.mrf.mxu0
        %954 = vdwg.mxu0
        %v955 = vmax.f32 %v952, 0.0
        %v956 = vpack.c.bf16 %v955, %v955
        %v957 = vld [vmem:[%s12] sm:$0xf]
        %v958 = vld [vmem:[%s12 + $0x4] sm:$0xf]
        %v959 = vld [vmem:[%s12 + $0x8] sm:$0xf]
        %v960 = vld [vmem:[%s12 + $0xc] sm:$0xf]
        %v961 = vld [vmem:[%s12 + $0x10] sm:$0xf]
        %v962 = vld [vmem:[%s12 + $0x14] sm:$0xf]
        %v963 = vld [vmem:[%s12 + $0x18] sm:$0xf]
        %v964 = vld [vmem:[%s12 + $0x1c] sm:$0xf]
        %v965 = vld [vmem:[%s13] sm:$0x1]
        %v967 = vperm.slane %v965, 0
        %v977 = vunpack.c.l.b16 %v957
        %v978 = vunpack.c.l.b16 %v958
        %v979 = vunpack.c.l.b16 %v959
        %v980 = vunpack.c.l.b16 %v960
        %v981 = vunpack.c.l.b16 %v961
        %v982 = vunpack.c.l.b16 %v962
        %v983 = vunpack.c.l.b16 %v963
        %v984 = vunpack.c.l.b16 %v964
        %v985 = vpack.c.b16 %v978, %v977
        %v986 = vpack.c.b16 %v980, %v979
        %v987 = vpack.c.b16 %v982, %v981
        %v988 = vpack.c.b16 %v984, %v983
        %vm993 = vcmask 523264
        %v995 = vsel %vm993, %v956, 0
        %997 = vmatpush.bf16.msra.mxu0 0
        %998 = vmatpush.bf16.msra.mxu0 0
        %999 = vmatpush.bf16.msra.mxu0 0
        %1000 = vmatpush.bf16.msra.mxu0 0
        %1001 = vmatpush.bf16.msra.mxu0 %v988
        %1002 = vmatpush.bf16.msra.mxu0 %v987
        %1003 = vmatpush.bf16.msra.mxu0 %v986
        %1004 = vmatpush.bf16.msra.mxu0 %v985
        %1005 = vmatmul.bf16.gmra.mxu0 %v995
        %v1006 = vpop.f32.mrf.mxu0
        %v1007 = vadd.f32 %v967, %v1006
        %v1008 = vpop.f32.mrf.mxu0
        %1009 = vdwg.mxu0
        %v1010 = vadd.f32 %v885, %v1007
        %1011 = vst.msk [vmem:[%s510] sm:$0xff] %vm519, %v1010
        %s1012 = sand.u32 %s344, 1
        %s1013 = scalar_lea.sflag [#allocation4], %s1012
        %s1014 = sand.u32 %s344, 1
        %s1015 = smul.addr %s1014, 8
        %s1016 = scalar_lea.vmem [#allocation7], %s1015
        // Predicated region
        $region85: #{tpu_custom_call.1} parent=75 // pred_check
          %p1017 = pneg %p354
        $region86: #{tpu_custom_call.1} parent=75 // pred_check_branch
          %1019 = sbr.rel (%p1017) target = $region88
        $region87: #{tpu_custom_call.1} parent=75 // pred_region
          %1021 = vsyncadd %s1013, 0
          %s1022 = smul.addr %s32, 8
          %s1023 = scalar_lea.hbm %s14, %s1022
          %s1025 = sshll.u32 %s1016, 4
          %s1026 = int_to_ptr.vmem [resolvable:$true] %s1025
          %s1027 = sshll.u32 %s1023, 4
          %s1028 = int_to_ptr.hbm [resolvable:$true] %s1027
          %1030 = dma.vmem_to_hbm [thread:$0]  %s1026, 128, %s1028, %s1013
        $region88: #{tpu_custom_call.1} parent=75 // pred_fallthru
          _
      $region76: #{tpu_custom_call.1} parent=5 // pred_fallthru
        _
      %p1031 = scmp.le.s32.totalorder 2, %s27
      // Predicated region
      $region89: #{tpu_custom_call.1} parent=5 // pred_check
        %p1032 = pneg %p1031
      $region90: #{tpu_custom_call.1} parent=5 // pred_check_branch
        %1034 = sbr.rel (%p1032) target = $region92
      $region91: #{tpu_custom_call.1} parent=5 // pred_region
        %s1035 = ssub.s32 %s27, 2
        // Predicated region
        $region93: #{tpu_custom_call.1} parent=91 // pred_check
          %p1036 = pneg %p360
        $region94: #{tpu_custom_call.1} parent=91 // pred_check_branch
          %1038 = sbr.rel (%p1036) target = $region96
        $region95: #{tpu_custom_call.1} parent=91 // pred_region
          %s1039 = sand.u32 %s345, 1
          %s1040 = scalar_lea.sflag [#allocation4], %s1039
          %s1041 = sand.u32 %s345, 1
          %s1042 = smul.addr %s1041, 8
          %s1043 = scalar_lea.vmem [#allocation7], %s1042
          %1045 = dma.done %s1040, 128
        $region96: #{tpu_custom_call.1} parent=91 // pred_fallthru
          _
      $region92: #{tpu_custom_call.1} parent=5 // pred_fallthru
        _
    $region6: #{tpu_custom_call.1} parent=1 // loop_footer
      %s31 = sadd.s32 1, %s27
    $region7: #{tpu_custom_call.1} parent=1 // loop_footer_branch
      %26 = sbr.rel target = $region3
    $region8: #{tpu_custom_call.1} parent=1 // loop_exit
      _
    %1046 = vsyncpa [#allocation3], 1
    %s1047 = scalar_lea.sflag [#allocation3], 1
    %1048 = vsyncpa %s1047, 1
    %1049 = vsyncpa [#allocation6], 1
    %1050 = vsyncpa [#allocation4], 1
    %s1051 = scalar_lea.sflag [#allocation4], 1
    %1052 = vsyncpa %s1051, 1

</llo_original>
